<compile_context>
chip_gen: v6e
topology: v6e:2x2x1
jax: 0.10.0
libtpu: 0.0.40
codegen_flags: <defaults>
</compile_context>

<pallas_src>
import jax
import jax.numpy as jnp
from jax.experimental import pallas as pl
from jax.experimental.pallas import tpu as pltpu

N_BLOCKS = 5      # number of (dropout, gate, dense) blocks
N_HEADS = 10      # number of output heads (folded into one vector host-side)


def _round_up(x, m):
    return (x + m - 1) // m * m


def tabular_kernel(x_ref, gw_ref, gb_ref, dw1_ref, dw2_ref, db_ref,
                   ow_ref, ob_ref, out_ref):
    """One batch tile.

    x_ref  : (TB, H)      bf16 activations (pipelined over the batch grid)
    gw_ref : (5, H, H)    bf16 gate weights        (VMEM-resident, all steps)
    gb_ref : (5, 1, H)    f32  gate biases
    dw1_ref: (5, H, H)    bf16 dense weights, rows [:H]  of the (2H, H) matrix
    dw2_ref: (5, H, H)    bf16 dense weights, rows [H:]  of the (2H, H) matrix
    db_ref : (5, 1, H)    f32  dense biases
    ow_ref : (H, 1)       bf16 folded output head (mean of the 10 heads)
    ob_ref : (1, 1)       f32  folded output bias
    out_ref: (TB, 1)      f32
    """
    # Residual/running activation kept in f32; matmul inputs cast to bf16.
    x = x_ref[...].astype(jnp.float32)

    for i in range(N_BLOCKS):          # static unroll over the 5 blocks
        # Dropout(p=0.2) in eval mode is the identity.
        xb = x.astype(gw_ref.dtype)
        gate = jax.nn.sigmoid(
            jnp.dot(xb, gw_ref[i], preferred_element_type=jnp.float32)
            + gb_ref[i])
        gated = x * gate

        # dense(cat([x, gated], dim=1)) == x @ W[:H] + gated @ W[H:]  (+ b).
        # Weights are pre-split host-side: no lane-axis concat in the kernel.
        upd = (jnp.dot(xb, dw1_ref[i], preferred_element_type=jnp.float32)
               + jnp.dot(gated.astype(dw2_ref.dtype), dw2_ref[i],
                         preferred_element_type=jnp.float32)
               + db_ref[i])
        x = x + upd

    # 10 heads + mean folded into one (H, 1) vector (exact, since mean is
    # linear) -> single clean MXU push, no (B, 10) intermediate.
    out_ref[...] = (
        jnp.dot(x.astype(ow_ref.dtype), ow_ref[...],
                preferred_element_type=jnp.float32)
        + ob_ref[...])


def tabular_forward_pallas(concat, gw, gb, dw, db, ow, ob, *, tb=512):
    """concat: (B, H); gw: (5,H,H); gb: (5,1,H); dw: (5,2H,H); db: (5,1,H);
    ow: (H,10); ob: (1,10).  Returns (B,) f32 — mean over the 10 heads."""
    B, H = concat.shape

    # ---- host-side weight preprocessing (exact transforms) -----------------
    ow_mean = jnp.mean(ow, axis=1, keepdims=True)            # (H, 1)
    ob_mean = jnp.mean(ob, axis=1, keepdims=True)            # (1, 1), f32
    dw1, dw2 = dw[:, :H, :], dw[:, H:, :]                    # split (2H, H)

    gw_b = gw.astype(jnp.bfloat16)
    dw1_b = dw1.astype(jnp.bfloat16)
    dw2_b = dw2.astype(jnp.bfloat16)
    ow_b = ow_mean.astype(jnp.bfloat16)
    x_b = concat.astype(jnp.bfloat16)                        # halve HBM reads

    gb_f = gb.astype(jnp.float32)
    db_f = db.astype(jnp.float32)
    ob_f = ob_mean.astype(jnp.float32)

    # ---- batch tiling -------------------------------------------------------
    TB = min(tb, _round_up(B, 8))        # sublane-aligned batch tile
    Bp = _round_up(B, TB)
    if Bp != B:
        x_b = jnp.pad(x_b, ((0, Bp - B), (0, 0)))
    grid = (Bp // TB,)

    act_spec = pl.BlockSpec((TB, H), lambda b: (b, 0))
    out_spec = pl.BlockSpec((TB, 1), lambda b: (b, 0))
    w3 = lambda a: pl.BlockSpec(a.shape, lambda b: (0, 0, 0))  # resident 3-D
    w2 = lambda a: pl.BlockSpec(a.shape, lambda b: (0, 0))     # resident 2-D

    # VMEM budget: resident weights + double-buffered activation tiles.
    weight_bytes = 2 * (gw_b.size + dw1_b.size + dw2_b.size + ow_b.size)
    bias_bytes = 4 * (gb_f.size + db_f.size + ob_f.size)
    act_bytes = 2 * (TB * H * 2) + 2 * (TB * 4)    # 2x-buffered in + out tiles
    needed = weight_bytes + bias_bytes + act_bytes + (4 << 20)
    # Only raise the scoped-VMEM limit when the default (32 MiB) is too small;
    # cap at 64 MiB so the request is valid on v7x as well as v5e/v6e.
    vmem_limit = None if needed <= (32 << 20) else int(min(64 << 20, needed))

    cp_kwargs = dict(dimension_semantics=("parallel",))   # megacore batch shard
    if vmem_limit is not None:
        cp_kwargs["vmem_limit_bytes"] = vmem_limit

    out = pl.pallas_call(
        tabular_kernel,
        out_shape=jax.ShapeDtypeStruct((Bp, 1), jnp.float32),
        grid=grid,
        in_specs=[
            act_spec,
            w3(gw_b), w3(gb_f),
            w3(dw1_b), w3(dw2_b), w3(db_f),
            w2(ow_b), w2(ob_f),
        ],
        out_specs=out_spec,
        compiler_params=pltpu.CompilerParams(**cp_kwargs),
    )(x_b, gw_b, gb_f, dw1_b, dw2_b, db_f, ow_b, ob_f)

    return out[:B, 0]


def embed_inputs(x, emb_tables, lin_w, lin_b):
    """Glue: embedding lookups + Linear(1, S) on the last column, concat dim=1."""
    parts = [jnp.take(tbl, x[:, i], axis=0) for i, tbl in enumerate(emb_tables)]
    last = x[:, -1].astype(jnp.float32)[:, None]               # (B, 1)
    parts.append(last @ lin_w + lin_b)                         # (B, S)
    return jnp.concatenate(parts, axis=1)                      # (B, H)


def reference_forward(concat, gw, gb, dw, db, ow, ob):
    """Pure-JAX reference mirroring the kernel's numerics (bf16 matmul inputs,
    f32 accumulation, folded head mean) for a tight correctness check."""
    H = concat.shape[1]
    ow_b = jnp.mean(ow, axis=1, keepdims=True).astype(jnp.bfloat16)
    ob_mean = jnp.mean(ob, axis=1, keepdims=True)
    gw_b = gw.astype(jnp.bfloat16)
    dw1_b = dw[:, :H, :].astype(jnp.bfloat16)
    dw2_b = dw[:, H:, :].astype(jnp.bfloat16)

    x = concat.astype(jnp.bfloat16).astype(jnp.float32)
    for i in range(N_BLOCKS):
        xb = x.astype(jnp.bfloat16)
        g = jax.nn.sigmoid(
            jnp.dot(xb, gw_b[i], preferred_element_type=jnp.float32) + gb[i])
        gated = x * g
        x = x + (jnp.dot(xb, dw1_b[i], preferred_element_type=jnp.float32)
                 + jnp.dot(gated.astype(jnp.bfloat16), dw2_b[i],
                           preferred_element_type=jnp.float32)
                 + db[i])
    out = (jnp.dot(x.astype(jnp.bfloat16), ow_b,
                   preferred_element_type=jnp.float32) + ob_mean)
    return out[:, 0]


if __name__ == "__main__":
    # Small deterministic config.
    input_dims = [5, 7, 9, 11]          # last entry's column is the "linear" feature
    start_neurons = 8
    n_cols = len(input_dims)
    H = start_neurons * n_cols           # 32
    B = 12                               # not a multiple of the tile -> exercises padding

    key = jax.random.PRNGKey(0)
    keys = jax.random.split(key, 16)

    # Embedding tables (one per categorical column) + Linear(1, start_neurons).
    emb_tables = [
        0.1 * jax.random.normal(keys[i], (dim, start_neurons), jnp.float32)
        for i, dim in enumerate(input_dims[:-1])
    ]
    lin_w = 0.1 * jax.random.normal(keys[4], (1, start_neurons), jnp.float32)
    lin_b = 0.1 * jax.random.normal(keys[5], (start_neurons,), jnp.float32)

    # 5 gate Linears (H -> H), 5 dense Linears (2H -> H), stored as (in, out).
    gw = 0.1 * jax.random.normal(keys[6], (N_BLOCKS, H, H), jnp.float32)
    gb = 0.1 * jax.random.normal(keys[7], (N_BLOCKS, 1, H), jnp.float32)
    dw = 0.1 * jax.random.normal(keys[8], (N_BLOCKS, 2 * H, H), jnp.float32)
    db = 0.1 * jax.random.normal(keys[9], (N_BLOCKS, 1, H), jnp.float32)

    # 10 output Linears (H -> 1), stacked as a single (H, 10) matrix.
    ow = 0.1 * jax.random.normal(keys[10], (H, N_HEADS), jnp.float32)
    ob = 0.1 * jax.random.normal(keys[11], (1, N_HEADS), jnp.float32)

    # Deterministic integer input: categorical indices per column, last column
    # is a raw numeric feature (cast to float inside the model).
    cols = []
    for i, dim in enumerate(input_dims[:-1]):
        cols.append(jax.random.randint(keys[12 + i], (B,), 0, dim, jnp.int32))
    cols.append(jax.random.randint(keys[15], (B,), 0, 100, jnp.int32))
    x = jnp.stack(cols, axis=1)          # (B, n_cols) int32

    concat = embed_inputs(x, emb_tables, lin_w, lin_b)     # (B, H)

    # tb=8 at this tiny B gives a 2-step batch grid (exercises the pipeline
    # and the padding path); production default is tb=512.
    out = tabular_forward_pallas(concat, gw, gb, dw, db, ow, ob, tb=8)
    out = jax.block_until_ready(out)

    ref = reference_forward(concat, gw, gb, dw, db, ow, ob)
    assert out.shape == (B,)
    assert jnp.allclose(out, ref, atol=1e-2, rtol=1e-2), (out, ref)

    print("KERNEL_OK")
</pallas_src>

<mosaic_0001>
module attributes {stable_mosaic.version = 11 : i64} {
  func.func @tabular_kernel(%arg0: i32, %arg1: memref<8x32xbf16, #tpu.memory_space<vmem>>, %arg2: memref<5x32x32xbf16, #tpu.memory_space<vmem>>, %arg3: memref<5x1x32xf32, #tpu.memory_space<vmem>>, %arg4: memref<5x32x32xbf16, #tpu.memory_space<vmem>>, %arg5: memref<5x32x32xbf16, #tpu.memory_space<vmem>>, %arg6: memref<5x1x32xf32, #tpu.memory_space<vmem>>, %arg7: memref<32x1xbf16, #tpu.memory_space<vmem>>, %arg8: memref<1x1xf32, #tpu.memory_space<vmem>>, %arg9: memref<8x1xf32, #tpu.memory_space<vmem>>) attributes {dimension_semantics = [#tpu.dimension_semantics<parallel>], iteration_bounds = array<i64: 2>, scalar_prefetch = 0 : i64, scratch_operands = 0 : i64, tpu.core_type = #tpu.core_type<tc>, window_params = [{transform_indices = @transform_0, window_bounds = array<i64: 8, 32>}, {pipeline_mode = #tpu.pipeline_mode<synchronous>, transform_indices = @transform_1, window_bounds = array<i64: 5, 32, 32>}, {pipeline_mode = #tpu.pipeline_mode<synchronous>, transform_indices = @transform_2, window_bounds = array<i64: 5, 1, 32>}, {pipeline_mode = #tpu.pipeline_mode<synchronous>, transform_indices = @transform_3, window_bounds = array<i64: 5, 32, 32>}, {pipeline_mode = #tpu.pipeline_mode<synchronous>, transform_indices = @transform_4, window_bounds = array<i64: 5, 32, 32>}, {pipeline_mode = #tpu.pipeline_mode<synchronous>, transform_indices = @transform_5, window_bounds = array<i64: 5, 1, 32>}, {pipeline_mode = #tpu.pipeline_mode<synchronous>, transform_indices = @transform_6, window_bounds = array<i64: 32, 1>}, {pipeline_mode = #tpu.pipeline_mode<synchronous>, transform_indices = @transform_7, window_bounds = array<i64: 1, 1>}, {transform_indices = @transform_8, window_bounds = array<i64: 8, 1>}]} {
    %c0 = arith.constant 0 : index
    %c0_0 = arith.constant 0 : index
    %0 = vector.load %arg1[%c0, %c0_0] : memref<8x32xbf16, #tpu.memory_space<vmem>>, vector<8x32xbf16>
    %1 = arith.extf %0 : vector<8x32xbf16> to vector<8x32xf32>
    %2 = arith.truncf %1 : vector<8x32xf32> to vector<8x32xbf16>
    %c0_1 = arith.constant 0 : index
    %c0_2 = arith.constant 0 : index
    %c0_3 = arith.constant 0 : index
    %3 = vector.load %arg2[%c0_1, %c0_2, %c0_3] : memref<5x32x32xbf16, #tpu.memory_space<vmem>>, vector<1x32x32xbf16>
    %4 = vector.shape_cast %3 : vector<1x32x32xbf16> to vector<32x32xbf16>
    %cst = arith.constant dense<0.000000e+00> : vector<8x32xf32>
    %5 = tpu.matmul %2, %4, %cst {dimension_numbers = #tpu.dot_dimension_numbers<[1], [0], [0], [1], [0, 0, 1, 1], [], []>} : vector<8x32xbf16>, vector<32x32xbf16>, vector<8x32xf32> -> vector<8x32xf32>
    %c0_4 = arith.constant 0 : index
    %c0_5 = arith.constant 0 : index
    %c0_6 = arith.constant 0 : index
    %6 = vector.load %arg3[%c0_4, %c0_5, %c0_6] : memref<5x1x32xf32, #tpu.memory_space<vmem>>, vector<1x1x32xf32>
    %7 = vector.shape_cast %6 : vector<1x1x32xf32> to vector<1x32xf32>
    %8 = vector.broadcast %7 : vector<1x32xf32> to vector<8x32xf32>
    %9 = arith.addf %5, %8 : vector<8x32xf32>
    %10 = arith.negf %9 : vector<8x32xf32>
    %11 = math.exp %10 : vector<8x32xf32>
    %cst_7 = arith.constant 1.000000e+00 : f32
    %12 = vector.broadcast %cst_7 : f32 to vector<8x32xf32>
    %13 = arith.addf %12, %11 : vector<8x32xf32>
    %14 = arith.divf %12, %13 : vector<8x32xf32>
    %15 = arith.mulf %1, %14 : vector<8x32xf32>
    %c0_8 = arith.constant 0 : index
    %c0_9 = arith.constant 0 : index
    %c0_10 = arith.constant 0 : index
    %16 = vector.load %arg4[%c0_8, %c0_9, %c0_10] : memref<5x32x32xbf16, #tpu.memory_space<vmem>>, vector<1x32x32xbf16>
    %17 = vector.shape_cast %16 : vector<1x32x32xbf16> to vector<32x32xbf16>
    %cst_11 = arith.constant dense<0.000000e+00> : vector<8x32xf32>
    %18 = tpu.matmul %2, %17, %cst_11 {dimension_numbers = #tpu.dot_dimension_numbers<[1], [0], [0], [1], [0, 0, 1, 1], [], []>} : vector<8x32xbf16>, vector<32x32xbf16>, vector<8x32xf32> -> vector<8x32xf32>
    %19 = arith.truncf %15 : vector<8x32xf32> to vector<8x32xbf16>
    %c0_12 = arith.constant 0 : index
    %c0_13 = arith.constant 0 : index
    %c0_14 = arith.constant 0 : index
    %20 = vector.load %arg5[%c0_12, %c0_13, %c0_14] : memref<5x32x32xbf16, #tpu.memory_space<vmem>>, vector<1x32x32xbf16>
    %21 = vector.shape_cast %20 : vector<1x32x32xbf16> to vector<32x32xbf16>
    %cst_15 = arith.constant dense<0.000000e+00> : vector<8x32xf32>
    %22 = tpu.matmul %19, %21, %cst_15 {dimension_numbers = #tpu.dot_dimension_numbers<[1], [0], [0], [1], [0, 0, 1, 1], [], []>} : vector<8x32xbf16>, vector<32x32xbf16>, vector<8x32xf32> -> vector<8x32xf32>
    %23 = arith.addf %18, %22 : vector<8x32xf32>
    %c0_16 = arith.constant 0 : index
    %c0_17 = arith.constant 0 : index
    %c0_18 = arith.constant 0 : index
    %24 = vector.load %arg6[%c0_16, %c0_17, %c0_18] : memref<5x1x32xf32, #tpu.memory_space<vmem>>, vector<1x1x32xf32>
    %25 = vector.shape_cast %24 : vector<1x1x32xf32> to vector<1x32xf32>
    %26 = vector.broadcast %25 : vector<1x32xf32> to vector<8x32xf32>
    %27 = arith.addf %23, %26 : vector<8x32xf32>
    %28 = arith.addf %1, %27 : vector<8x32xf32>
    %29 = arith.truncf %28 : vector<8x32xf32> to vector<8x32xbf16>
    %c1 = arith.constant 1 : index
    %c0_19 = arith.constant 0 : index
    %c0_20 = arith.constant 0 : index
    %30 = vector.load %arg2[%c1, %c0_19, %c0_20] : memref<5x32x32xbf16, #tpu.memory_space<vmem>>, vector<1x32x32xbf16>
    %31 = vector.shape_cast %30 : vector<1x32x32xbf16> to vector<32x32xbf16>
    %cst_21 = arith.constant dense<0.000000e+00> : vector<8x32xf32>
    %32 = tpu.matmul %29, %31, %cst_21 {dimension_numbers = #tpu.dot_dimension_numbers<[1], [0], [0], [1], [0, 0, 1, 1], [], []>} : vector<8x32xbf16>, vector<32x32xbf16>, vector<8x32xf32> -> vector<8x32xf32>
    %c1_22 = arith.constant 1 : index
    %c0_23 = arith.constant 0 : index
    %c0_24 = arith.constant 0 : index
    %33 = vector.load %arg3[%c1_22, %c0_23, %c0_24] : memref<5x1x32xf32, #tpu.memory_space<vmem>>, vector<1x1x32xf32>
    %34 = vector.shape_cast %33 : vector<1x1x32xf32> to vector<1x32xf32>
    %35 = vector.broadcast %34 : vector<1x32xf32> to vector<8x32xf32>
    %36 = arith.addf %32, %35 : vector<8x32xf32>
    %37 = arith.negf %36 : vector<8x32xf32>
    %38 = math.exp %37 : vector<8x32xf32>
    %cst_25 = arith.constant 1.000000e+00 : f32
    %39 = vector.broadcast %cst_25 : f32 to vector<8x32xf32>
    %40 = arith.addf %39, %38 : vector<8x32xf32>
    %41 = arith.divf %39, %40 : vector<8x32xf32>
    %42 = arith.mulf %28, %41 : vector<8x32xf32>
    %c1_26 = arith.constant 1 : index
    %c0_27 = arith.constant 0 : index
    %c0_28 = arith.constant 0 : index
    %43 = vector.load %arg4[%c1_26, %c0_27, %c0_28] : memref<5x32x32xbf16, #tpu.memory_space<vmem>>, vector<1x32x32xbf16>
    %44 = vector.shape_cast %43 : vector<1x32x32xbf16> to vector<32x32xbf16>
    %cst_29 = arith.constant dense<0.000000e+00> : vector<8x32xf32>
    %45 = tpu.matmul %29, %44, %cst_29 {dimension_numbers = #tpu.dot_dimension_numbers<[1], [0], [0], [1], [0, 0, 1, 1], [], []>} : vector<8x32xbf16>, vector<32x32xbf16>, vector<8x32xf32> -> vector<8x32xf32>
    %46 = arith.truncf %42 : vector<8x32xf32> to vector<8x32xbf16>
    %c1_30 = arith.constant 1 : index
    %c0_31 = arith.constant 0 : index
    %c0_32 = arith.constant 0 : index
    %47 = vector.load %arg5[%c1_30, %c0_31, %c0_32] : memref<5x32x32xbf16, #tpu.memory_space<vmem>>, vector<1x32x32xbf16>
    %48 = vector.shape_cast %47 : vector<1x32x32xbf16> to vector<32x32xbf16>
    %cst_33 = arith.constant dense<0.000000e+00> : vector<8x32xf32>
    %49 = tpu.matmul %46, %48, %cst_33 {dimension_numbers = #tpu.dot_dimension_numbers<[1], [0], [0], [1], [0, 0, 1, 1], [], []>} : vector<8x32xbf16>, vector<32x32xbf16>, vector<8x32xf32> -> vector<8x32xf32>
    %50 = arith.addf %45, %49 : vector<8x32xf32>
    %c1_34 = arith.constant 1 : index
    %c0_35 = arith.constant 0 : index
    %c0_36 = arith.constant 0 : index
    %51 = vector.load %arg6[%c1_34, %c0_35, %c0_36] : memref<5x1x32xf32, #tpu.memory_space<vmem>>, vector<1x1x32xf32>
    %52 = vector.shape_cast %51 : vector<1x1x32xf32> to vector<1x32xf32>
    %53 = vector.broadcast %52 : vector<1x32xf32> to vector<8x32xf32>
    %54 = arith.addf %50, %53 : vector<8x32xf32>
    %55 = arith.addf %28, %54 : vector<8x32xf32>
    %56 = arith.truncf %55 : vector<8x32xf32> to vector<8x32xbf16>
    %c2 = arith.constant 2 : index
    %c0_37 = arith.constant 0 : index
    %c0_38 = arith.constant 0 : index
    %57 = vector.load %arg2[%c2, %c0_37, %c0_38] : memref<5x32x32xbf16, #tpu.memory_space<vmem>>, vector<1x32x32xbf16>
    %58 = vector.shape_cast %57 : vector<1x32x32xbf16> to vector<32x32xbf16>
    %cst_39 = arith.constant dense<0.000000e+00> : vector<8x32xf32>
    %59 = tpu.matmul %56, %58, %cst_39 {dimension_numbers = #tpu.dot_dimension_numbers<[1], [0], [0], [1], [0, 0, 1, 1], [], []>} : vector<8x32xbf16>, vector<32x32xbf16>, vector<8x32xf32> -> vector<8x32xf32>
    %c2_40 = arith.constant 2 : index
    %c0_41 = arith.constant 0 : index
    %c0_42 = arith.constant 0 : index
    %60 = vector.load %arg3[%c2_40, %c0_41, %c0_42] : memref<5x1x32xf32, #tpu.memory_space<vmem>>, vector<1x1x32xf32>
    %61 = vector.shape_cast %60 : vector<1x1x32xf32> to vector<1x32xf32>
    %62 = vector.broadcast %61 : vector<1x32xf32> to vector<8x32xf32>
    %63 = arith.addf %59, %62 : vector<8x32xf32>
    %64 = arith.negf %63 : vector<8x32xf32>
    %65 = math.exp %64 : vector<8x32xf32>
    %cst_43 = arith.constant 1.000000e+00 : f32
    %66 = vector.broadcast %cst_43 : f32 to vector<8x32xf32>
    %67 = arith.addf %66, %65 : vector<8x32xf32>
    %68 = arith.divf %66, %67 : vector<8x32xf32>
    %69 = arith.mulf %55, %68 : vector<8x32xf32>
    %c2_44 = arith.constant 2 : index
    %c0_45 = arith.constant 0 : index
    %c0_46 = arith.constant 0 : index
    %70 = vector.load %arg4[%c2_44, %c0_45, %c0_46] : memref<5x32x32xbf16, #tpu.memory_space<vmem>>, vector<1x32x32xbf16>
    %71 = vector.shape_cast %70 : vector<1x32x32xbf16> to vector<32x32xbf16>
    %cst_47 = arith.constant dense<0.000000e+00> : vector<8x32xf32>
    %72 = tpu.matmul %56, %71, %cst_47 {dimension_numbers = #tpu.dot_dimension_numbers<[1], [0], [0], [1], [0, 0, 1, 1], [], []>} : vector<8x32xbf16>, vector<32x32xbf16>, vector<8x32xf32> -> vector<8x32xf32>
    %73 = arith.truncf %69 : vector<8x32xf32> to vector<8x32xbf16>
    %c2_48 = arith.constant 2 : index
    %c0_49 = arith.constant 0 : index
    %c0_50 = arith.constant 0 : index
    %74 = vector.load %arg5[%c2_48, %c0_49, %c0_50] : memref<5x32x32xbf16, #tpu.memory_space<vmem>>, vector<1x32x32xbf16>
    %75 = vector.shape_cast %74 : vector<1x32x32xbf16> to vector<32x32xbf16>
    %cst_51 = arith.constant dense<0.000000e+00> : vector<8x32xf32>
    %76 = tpu.matmul %73, %75, %cst_51 {dimension_numbers = #tpu.dot_dimension_numbers<[1], [0], [0], [1], [0, 0, 1, 1], [], []>} : vector<8x32xbf16>, vector<32x32xbf16>, vector<8x32xf32> -> vector<8x32xf32>
    %77 = arith.addf %72, %76 : vector<8x32xf32>
    %c2_52 = arith.constant 2 : index
    %c0_53 = arith.constant 0 : index
    %c0_54 = arith.constant 0 : index
    %78 = vector.load %arg6[%c2_52, %c0_53, %c0_54] : memref<5x1x32xf32, #tpu.memory_space<vmem>>, vector<1x1x32xf32>
    %79 = vector.shape_cast %78 : vector<1x1x32xf32> to vector<1x32xf32>
    %80 = vector.broadcast %79 : vector<1x32xf32> to vector<8x32xf32>
    %81 = arith.addf %77, %80 : vector<8x32xf32>
    %82 = arith.addf %55, %81 : vector<8x32xf32>
    %83 = arith.truncf %82 : vector<8x32xf32> to vector<8x32xbf16>
    %c3 = arith.constant 3 : index
    %c0_55 = arith.constant 0 : index
    %c0_56 = arith.constant 0 : index
    %84 = vector.load %arg2[%c3, %c0_55, %c0_56] : memref<5x32x32xbf16, #tpu.memory_space<vmem>>, vector<1x32x32xbf16>
    %85 = vector.shape_cast %84 : vector<1x32x32xbf16> to vector<32x32xbf16>
    %cst_57 = arith.constant dense<0.000000e+00> : vector<8x32xf32>
    %86 = tpu.matmul %83, %85, %cst_57 {dimension_numbers = #tpu.dot_dimension_numbers<[1], [0], [0], [1], [0, 0, 1, 1], [], []>} : vector<8x32xbf16>, vector<32x32xbf16>, vector<8x32xf32> -> vector<8x32xf32>
    %c3_58 = arith.constant 3 : index
    %c0_59 = arith.constant 0 : index
    %c0_60 = arith.constant 0 : index
    %87 = vector.load %arg3[%c3_58, %c0_59, %c0_60] : memref<5x1x32xf32, #tpu.memory_space<vmem>>, vector<1x1x32xf32>
    %88 = vector.shape_cast %87 : vector<1x1x32xf32> to vector<1x32xf32>
    %89 = vector.broadcast %88 : vector<1x32xf32> to vector<8x32xf32>
    %90 = arith.addf %86, %89 : vector<8x32xf32>
    %91 = arith.negf %90 : vector<8x32xf32>
    %92 = math.exp %91 : vector<8x32xf32>
    %cst_61 = arith.constant 1.000000e+00 : f32
    %93 = vector.broadcast %cst_61 : f32 to vector<8x32xf32>
    %94 = arith.addf %93, %92 : vector<8x32xf32>
    %95 = arith.divf %93, %94 : vector<8x32xf32>
    %96 = arith.mulf %82, %95 : vector<8x32xf32>
    %c3_62 = arith.constant 3 : index
    %c0_63 = arith.constant 0 : index
    %c0_64 = arith.constant 0 : index
    %97 = vector.load %arg4[%c3_62, %c0_63, %c0_64] : memref<5x32x32xbf16, #tpu.memory_space<vmem>>, vector<1x32x32xbf16>
    %98 = vector.shape_cast %97 : vector<1x32x32xbf16> to vector<32x32xbf16>
    %cst_65 = arith.constant dense<0.000000e+00> : vector<8x32xf32>
    %99 = tpu.matmul %83, %98, %cst_65 {dimension_numbers = #tpu.dot_dimension_numbers<[1], [0], [0], [1], [0, 0, 1, 1], [], []>} : vector<8x32xbf16>, vector<32x32xbf16>, vector<8x32xf32> -> vector<8x32xf32>
    %100 = arith.truncf %96 : vector<8x32xf32> to vector<8x32xbf16>
    %c3_66 = arith.constant 3 : index
    %c0_67 = arith.constant 0 : index
    %c0_68 = arith.constant 0 : index
    %101 = vector.load %arg5[%c3_66, %c0_67, %c0_68] : memref<5x32x32xbf16, #tpu.memory_space<vmem>>, vector<1x32x32xbf16>
    %102 = vector.shape_cast %101 : vector<1x32x32xbf16> to vector<32x32xbf16>
    %cst_69 = arith.constant dense<0.000000e+00> : vector<8x32xf32>
    %103 = tpu.matmul %100, %102, %cst_69 {dimension_numbers = #tpu.dot_dimension_numbers<[1], [0], [0], [1], [0, 0, 1, 1], [], []>} : vector<8x32xbf16>, vector<32x32xbf16>, vector<8x32xf32> -> vector<8x32xf32>
    %104 = arith.addf %99, %103 : vector<8x32xf32>
    %c3_70 = arith.constant 3 : index
    %c0_71 = arith.constant 0 : index
    %c0_72 = arith.constant 0 : index
    %105 = vector.load %arg6[%c3_70, %c0_71, %c0_72] : memref<5x1x32xf32, #tpu.memory_space<vmem>>, vector<1x1x32xf32>
    %106 = vector.shape_cast %105 : vector<1x1x32xf32> to vector<1x32xf32>
    %107 = vector.broadcast %106 : vector<1x32xf32> to vector<8x32xf32>
    %108 = arith.addf %104, %107 : vector<8x32xf32>
    %109 = arith.addf %82, %108 : vector<8x32xf32>
    %110 = arith.truncf %109 : vector<8x32xf32> to vector<8x32xbf16>
    %c4 = arith.constant 4 : index
    %c0_73 = arith.constant 0 : index
    %c0_74 = arith.constant 0 : index
    %111 = vector.load %arg2[%c4, %c0_73, %c0_74] : memref<5x32x32xbf16, #tpu.memory_space<vmem>>, vector<1x32x32xbf16>
    %112 = vector.shape_cast %111 : vector<1x32x32xbf16> to vector<32x32xbf16>
    %cst_75 = arith.constant dense<0.000000e+00> : vector<8x32xf32>
    %113 = tpu.matmul %110, %112, %cst_75 {dimension_numbers = #tpu.dot_dimension_numbers<[1], [0], [0], [1], [0, 0, 1, 1], [], []>} : vector<8x32xbf16>, vector<32x32xbf16>, vector<8x32xf32> -> vector<8x32xf32>
    %c4_76 = arith.constant 4 : index
    %c0_77 = arith.constant 0 : index
    %c0_78 = arith.constant 0 : index
    %114 = vector.load %arg3[%c4_76, %c0_77, %c0_78] : memref<5x1x32xf32, #tpu.memory_space<vmem>>, vector<1x1x32xf32>
    %115 = vector.shape_cast %114 : vector<1x1x32xf32> to vector<1x32xf32>
    %116 = vector.broadcast %115 : vector<1x32xf32> to vector<8x32xf32>
    %117 = arith.addf %113, %116 : vector<8x32xf32>
    %118 = arith.negf %117 : vector<8x32xf32>
    %119 = math.exp %118 : vector<8x32xf32>
    %cst_79 = arith.constant 1.000000e+00 : f32
    %120 = vector.broadcast %cst_79 : f32 to vector<8x32xf32>
    %121 = arith.addf %120, %119 : vector<8x32xf32>
    %122 = arith.divf %120, %121 : vector<8x32xf32>
    %123 = arith.mulf %109, %122 : vector<8x32xf32>
    %c4_80 = arith.constant 4 : index
    %c0_81 = arith.constant 0 : index
    %c0_82 = arith.constant 0 : index
    %124 = vector.load %arg4[%c4_80, %c0_81, %c0_82] : memref<5x32x32xbf16, #tpu.memory_space<vmem>>, vector<1x32x32xbf16>
    %125 = vector.shape_cast %124 : vector<1x32x32xbf16> to vector<32x32xbf16>
    %cst_83 = arith.constant dense<0.000000e+00> : vector<8x32xf32>
    %126 = tpu.matmul %110, %125, %cst_83 {dimension_numbers = #tpu.dot_dimension_numbers<[1], [0], [0], [1], [0, 0, 1, 1], [], []>} : vector<8x32xbf16>, vector<32x32xbf16>, vector<8x32xf32> -> vector<8x32xf32>
    %127 = arith.truncf %123 : vector<8x32xf32> to vector<8x32xbf16>
    %c4_84 = arith.constant 4 : index
    %c0_85 = arith.constant 0 : index
    %c0_86 = arith.constant 0 : index
    %128 = vector.load %arg5[%c4_84, %c0_85, %c0_86] : memref<5x32x32xbf16, #tpu.memory_space<vmem>>, vector<1x32x32xbf16>
    %129 = vector.shape_cast %128 : vector<1x32x32xbf16> to vector<32x32xbf16>
    %cst_87 = arith.constant dense<0.000000e+00> : vector<8x32xf32>
    %130 = tpu.matmul %127, %129, %cst_87 {dimension_numbers = #tpu.dot_dimension_numbers<[1], [0], [0], [1], [0, 0, 1, 1], [], []>} : vector<8x32xbf16>, vector<32x32xbf16>, vector<8x32xf32> -> vector<8x32xf32>
    %131 = arith.addf %126, %130 : vector<8x32xf32>
    %c4_88 = arith.constant 4 : index
    %c0_89 = arith.constant 0 : index
    %c0_90 = arith.constant 0 : index
    %132 = vector.load %arg6[%c4_88, %c0_89, %c0_90] : memref<5x1x32xf32, #tpu.memory_space<vmem>>, vector<1x1x32xf32>
    %133 = vector.shape_cast %132 : vector<1x1x32xf32> to vector<1x32xf32>
    %134 = vector.broadcast %133 : vector<1x32xf32> to vector<8x32xf32>
    %135 = arith.addf %131, %134 : vector<8x32xf32>
    %136 = arith.addf %109, %135 : vector<8x32xf32>
    %137 = arith.truncf %136 : vector<8x32xf32> to vector<8x32xbf16>
    %c0_91 = arith.constant 0 : index
    %c0_92 = arith.constant 0 : index
    %138 = vector.load %arg7[%c0_91, %c0_92] : memref<32x1xbf16, #tpu.memory_space<vmem>>, vector<32x1xbf16>
    %cst_93 = arith.constant dense<0.000000e+00> : vector<8x1xf32>
    %139 = tpu.matmul %137, %138, %cst_93 {dimension_numbers = #tpu.dot_dimension_numbers<[1], [0], [0], [1], [0, 0, 1, 1], [], []>} : vector<8x32xbf16>, vector<32x1xbf16>, vector<8x1xf32> -> vector<8x1xf32>
    %c0_94 = arith.constant 0 : index
    %c0_95 = arith.constant 0 : index
    %140 = vector.load %arg8[%c0_94, %c0_95] : memref<1x1xf32, #tpu.memory_space<vmem>>, vector<1x1xf32>
    %141 = vector.broadcast %140 : vector<1x1xf32> to vector<8x1xf32>
    %142 = arith.addf %139, %141 : vector<8x1xf32>
    %c0_96 = arith.constant 0 : index
    %c0_97 = arith.constant 0 : index
    %143 = vector.load %arg9[%c0_96, %c0_97] : memref<8x1xf32, #tpu.memory_space<vmem>>, vector<8x1xf32>
    tpu.vector_store %arg9[%c0_96, %c0_97], %142 {strides = array<i32>} : memref<8x1xf32, #tpu.memory_space<vmem>>, vector<8x1xf32>,
    return
  }
  func.func @transform_0(%arg0: i32) -> (i32, i32) {
    %c0_i32 = arith.constant 0 : i32
    %c0_i32_0 = arith.constant 0 : i32
    return %arg0, %c0_i32 : i32, i32
  }
  func.func @transform_1(%arg0: i32) -> (i32, i32, i32) {
    %c0_i32 = arith.constant 0 : i32
    %c0_i32_0 = arith.constant 0 : i32
    %c0_i32_1 = arith.constant 0 : i32
    %c0_i32_2 = arith.constant 0 : i32
    return %c0_i32, %c0_i32_0, %c0_i32_1 : i32, i32, i32
  }
  func.func @transform_2(%arg0: i32) -> (i32, i32, i32) {
    %c0_i32 = arith.constant 0 : i32
    %c0_i32_0 = arith.constant 0 : i32
    %c0_i32_1 = arith.constant 0 : i32
    %c0_i32_2 = arith.constant 0 : i32
    return %c0_i32, %c0_i32_0, %c0_i32_1 : i32, i32, i32
  }
  func.func @transform_3(%arg0: i32) -> (i32, i32, i32) {
    %c0_i32 = arith.constant 0 : i32
    %c0_i32_0 = arith.constant 0 : i32
    %c0_i32_1 = arith.constant 0 : i32
    %c0_i32_2 = arith.constant 0 : i32
    return %c0_i32, %c0_i32_0, %c0_i32_1 : i32, i32, i32
  }
  func.func @transform_4(%arg0: i32) -> (i32, i32, i32) {
    %c0_i32 = arith.constant 0 : i32
    %c0_i32_0 = arith.constant 0 : i32
    %c0_i32_1 = arith.constant 0 : i32
    %c0_i32_2 = arith.constant 0 : i32
    return %c0_i32, %c0_i32_0, %c0_i32_1 : i32, i32, i32
  }
  func.func @transform_5(%arg0: i32) -> (i32, i32, i32) {
    %c0_i32 = arith.constant 0 : i32
    %c0_i32_0 = arith.constant 0 : i32
    %c0_i32_1 = arith.constant 0 : i32
    %c0_i32_2 = arith.constant 0 : i32
    return %c0_i32, %c0_i32_0, %c0_i32_1 : i32, i32, i32
  }
  func.func @transform_6(%arg0: i32) -> (i32, i32) {
    %c0_i32 = arith.constant 0 : i32
    %c0_i32_0 = arith.constant 0 : i32
    %c0_i32_1 = arith.constant 0 : i32
    return %c0_i32, %c0_i32_0 : i32, i32
  }
  func.func @transform_7(%arg0: i32) -> (i32, i32) {
    %c0_i32 = arith.constant 0 : i32
    %c0_i32_0 = arith.constant 0 : i32
    %c0_i32_1 = arith.constant 0 : i32
    return %c0_i32, %c0_i32_0 : i32, i32
  }
  func.func @transform_8(%arg0: i32) -> (i32, i32) {
    %c0_i32 = arith.constant 0 : i32
    %c0_i32_0 = arith.constant 0 : i32
    return %arg0, %c0_i32 : i32, i32
  }
}

</mosaic_0001>

<llo_original>
// kernel: tpu_custom_call.1
$region0: #{tpu_custom_call.1}
  #allocation0 [shape = 'u32[]', space=smem, size = 0x4, offset = 0x4, fixed_abs, tag = 'smem constant byte address 0x4 - core index']
  #allocation1 [shape = 'u32[144,128]{1,0:T(1,128)}', space=vmem, size = 0x12000, scoped, tag = 'internal scratch']
  #allocation2 [shape = 'f32[1,1]{1,0:T(1,128)S(1)}', space=vmem, size = 0x200, scoped, tag = 'scoped memory for tpu_custom_call.1']
  %s0 = inlined_call_operand.vmem [shape: bf16[16,32], index: 0, kind: input, shape index: {}]
  %s1 = inlined_call_operand.hbm [shape: bf16[5,32,32], index: 1, kind: input, shape index: {}]
  %s2 = inlined_call_operand.vmem [shape: f32[5,1,32], index: 2, kind: input, shape index: {}]
  %s3 = inlined_call_operand.hbm [shape: bf16[5,32,32], index: 3, kind: input, shape index: {}]
  %s4 = inlined_call_operand.hbm [shape: bf16[5,32,32], index: 4, kind: input, shape index: {}]
  %s5 = inlined_call_operand.vmem [shape: f32[5,1,32], index: 5, kind: input, shape index: {}]
  %s6 = inlined_call_operand.vmem [shape: bf16[32,1], index: 6, kind: input, shape index: {}]
  %s7 = inlined_call_operand.<no memory space> [shape: f32[1,1], index: 7, kind: input, shape index: {}]
  %s8 = inlined_call_operand.vmem [shape: f32[16,1], index: 8, kind: output, shape index: {}]
  %s9 = sld [smem:[#allocation0]]
  $region77: #{tpu_custom_call.1} parent=0
    _
  %s11 = ssub.s32 1, %s9
  %s12 = scalar_select 0, %s11, %s9
  %v13 = vstv %s7
  %14 = vst [vmem:[#allocation2] sm:$0x1] %v13
  $region1: #{tpu_custom_call.1} parent=0
    #allocation3 [shape = 'u8[40960]{0}', space=vmem, size = 0xa000, scoped, tag = 'input window, operand 1, single buffered']
    #allocation4 [shape = 's32[2]{0}', space=sflag, size = 0x8, scoped, tag = 'scoped memory for tpu_custom_call.1']
    #allocation5 [shape = 'u8[40960]{0}', space=vmem, size = 0xa000, scoped, tag = 'input window, operand 3, single buffered']
    #allocation6 [shape = 's32[1]{0}', space=sflag, size = 0x4, scoped, tag = 'scoped memory for tpu_custom_call.1']
    #allocation7 [shape = 'u8[40960]{0}', space=vmem, size = 0xa000, scoped, tag = 'input window, operand 4, single buffered']
    %15 = vsyncpa [#allocation4], 0
    %16 = vsyncpa [#allocation6], 0
    loop: start=0, step=1, limit=4
    $region2: #{tpu_custom_call.1} parent=1 // loop_pre_header
      _
    $region3: #{tpu_custom_call.1} parent=1 // loop_header
      %s18 = sphi 0, %s22
      %p19 = scmp.ge.s32.totalorder %s18, 4
      %s28 = sphi 0, %s30
      %s31 = sphi 0, %s28
      %s32 = sphi 0, %s31
      %s48 = sphi 0, %s32
      %s52 = sphi 0, %s52
      %s54 = sphi 0, %s52
      %s55 = sphi 0, %s54
      %s69 = sphi 0, %s55
      %s73 = sphi 0, %s73
      %s75 = sphi 0, %s73
      %s76 = sphi 0, %s75
      %s90 = sphi 0, %s76
      %s94 = sphi 0, %s94
      %s96 = sphi 0, %s94
      %s97 = sphi 0, %s96
      %s111 = sphi 0, %s97
      %s115 = sphi 0, %s115
      %s117 = sphi 0, %s115
      %s118 = sphi 0, %s117
      %s132 = sphi 0, %s118
      %s136 = sphi 0, %s136
      %s138 = sphi 0, %s136
      %s139 = sphi 0, %s138
      %s153 = sphi 0, %s139
      %s157 = sphi 0, %s157
      %s159 = sphi 0, %s157
      %s160 = sphi 0, %s159
      %s174 = sphi 0, %s160
      %s178 = sphi 0, %s178
      %s180 = sphi 0, %s178
      %s181 = sphi 0, %s180
      %s195 = sphi 0, %s181
      %s201 = sphi 0, %s203
      %s204 = sphi 0, %s201
      %s205 = sphi 0, %s204
      %s221 = sphi 0, %s205
    $region4: #{tpu_custom_call.1} parent=1 // loop_header_branch
      %21 = sbr.rel (%p19) target = $region8
    $region5: #{tpu_custom_call.1} parent=1 // loop_body
      %s23 = ssub.s32 %s18, 1
      %s24 = ssub.s32 %s18, 2
      %s25 = sadd.s32 %s18, 1
      %s26 = ssub.s32 %s18, %s25
      %p27 = scmp.eq.s32.totalorder %s26, 0
      %s29 = sadd.s32 %s28, 1
      %s30 = scalar_select %p27, %s28, %s29
      %p33 = pneg %p27
      %p34 = scmp.eq.s32.totalorder %s18, 1
      %p35 = por %p33, %p34
      %p36 = scmp.ne.s32.totalorder %s28, %s31
      %p37 = scmp.eq.s32.totalorder %s18, 0
      %p38 = por %p36, %p37
      %p39 = scmp.ne.s32.totalorder %s28, %s31
      %p40 = scmp.eq.s32.totalorder %s23, 1
      %p41 = por %p39, %p40
      %p42 = scmp.ne.s32.totalorder %s31, %s32
      %p43 = scmp.eq.s32.totalorder %s23, 0
      %p44 = por %p42, %p43
      %p45 = scmp.ne.s32.totalorder %s31, %s32
      %p46 = scmp.eq.s32.totalorder %s24, 1
      %p47 = por %p45, %p46
      %p49 = scmp.ne.s32.totalorder %s32, %s48
      %p50 = scmp.eq.s32.totalorder %s24, 0
      %p51 = por %p49, %p50
      %s53 = sadd.s32 %s52, 1
      %p56 = scmp.eq.s32.totalorder %s18, 1
      %p57 = scmp.ne.s32.totalorder %s52, %s54
      %p58 = scmp.eq.s32.totalorder %s18, 0
      %p59 = por %p57, %p58
      %p60 = scmp.ne.s32.totalorder %s52, %s54
      %p61 = scmp.eq.s32.totalorder %s23, 1
      %p62 = por %p60, %p61
      %p63 = scmp.ne.s32.totalorder %s54, %s55
      %p64 = scmp.eq.s32.totalorder %s23, 0
      %p65 = por %p63, %p64
      %p66 = scmp.ne.s32.totalorder %s54, %s55
      %p67 = scmp.eq.s32.totalorder %s24, 1
      %p68 = por %p66, %p67
      %p70 = scmp.ne.s32.totalorder %s55, %s69
      %p71 = scmp.eq.s32.totalorder %s24, 0
      %p72 = por %p70, %p71
      %s74 = sadd.s32 %s73, 1
      %p77 = scmp.eq.s32.totalorder %s18, 1
      %p78 = scmp.ne.s32.totalorder %s73, %s75
      %p79 = scmp.eq.s32.totalorder %s18, 0
      %p80 = por %p78, %p79
      %p81 = scmp.ne.s32.totalorder %s73, %s75
      %p82 = scmp.eq.s32.totalorder %s23, 1
      %p83 = por %p81, %p82
      %p84 = scmp.ne.s32.totalorder %s75, %s76
      %p85 = scmp.eq.s32.totalorder %s23, 0
      %p86 = por %p84, %p85
      %p87 = scmp.ne.s32.totalorder %s75, %s76
      %p88 = scmp.eq.s32.totalorder %s24, 1
      %p89 = por %p87, %p88
      %p91 = scmp.ne.s32.totalorder %s76, %s90
      %p92 = scmp.eq.s32.totalorder %s24, 0
      %p93 = por %p91, %p92
      %s95 = sadd.s32 %s94, 1
      %p98 = scmp.eq.s32.totalorder %s18, 1
      %p99 = scmp.ne.s32.totalorder %s94, %s96
      %p100 = scmp.eq.s32.totalorder %s18, 0
      %p101 = por %p99, %p100
      %p102 = scmp.ne.s32.totalorder %s94, %s96
      %p103 = scmp.eq.s32.totalorder %s23, 1
      %p104 = por %p102, %p103
      %p105 = scmp.ne.s32.totalorder %s96, %s97
      %p106 = scmp.eq.s32.totalorder %s23, 0
      %p107 = por %p105, %p106
      %p108 = scmp.ne.s32.totalorder %s96, %s97
      %p109 = scmp.eq.s32.totalorder %s24, 1
      %p110 = por %p108, %p109
      %p112 = scmp.ne.s32.totalorder %s97, %s111
      %p113 = scmp.eq.s32.totalorder %s24, 0
      %p114 = por %p112, %p113
      %s116 = sadd.s32 %s115, 1
      %p119 = scmp.eq.s32.totalorder %s18, 1
      %p120 = scmp.ne.s32.totalorder %s115, %s117
      %p121 = scmp.eq.s32.totalorder %s18, 0
      %p122 = por %p120, %p121
      %p123 = scmp.ne.s32.totalorder %s115, %s117
      %p124 = scmp.eq.s32.totalorder %s23, 1
      %p125 = por %p123, %p124
      %p126 = scmp.ne.s32.totalorder %s117, %s118
      %p127 = scmp.eq.s32.totalorder %s23, 0
      %p128 = por %p126, %p127
      %p129 = scmp.ne.s32.totalorder %s117, %s118
      %p130 = scmp.eq.s32.totalorder %s24, 1
      %p131 = por %p129, %p130
      %p133 = scmp.ne.s32.totalorder %s118, %s132
      %p134 = scmp.eq.s32.totalorder %s24, 0
      %p135 = por %p133, %p134
      %s137 = sadd.s32 %s136, 1
      %p140 = scmp.eq.s32.totalorder %s18, 1
      %p141 = scmp.ne.s32.totalorder %s136, %s138
      %p142 = scmp.eq.s32.totalorder %s18, 0
      %p143 = por %p141, %p142
      %p144 = scmp.ne.s32.totalorder %s136, %s138
      %p145 = scmp.eq.s32.totalorder %s23, 1
      %p146 = por %p144, %p145
      %p147 = scmp.ne.s32.totalorder %s138, %s139
      %p148 = scmp.eq.s32.totalorder %s23, 0
      %p149 = por %p147, %p148
      %p150 = scmp.ne.s32.totalorder %s138, %s139
      %p151 = scmp.eq.s32.totalorder %s24, 1
      %p152 = por %p150, %p151
      %p154 = scmp.ne.s32.totalorder %s139, %s153
      %p155 = scmp.eq.s32.totalorder %s24, 0
      %p156 = por %p154, %p155
      %s158 = sadd.s32 %s157, 1
      %p161 = scmp.eq.s32.totalorder %s18, 1
      %p162 = scmp.ne.s32.totalorder %s157, %s159
      %p163 = scmp.eq.s32.totalorder %s18, 0
      %p164 = por %p162, %p163
      %p165 = scmp.ne.s32.totalorder %s157, %s159
      %p166 = scmp.eq.s32.totalorder %s23, 1
      %p167 = por %p165, %p166
      %p168 = scmp.ne.s32.totalorder %s159, %s160
      %p169 = scmp.eq.s32.totalorder %s23, 0
      %p170 = por %p168, %p169
      %p171 = scmp.ne.s32.totalorder %s159, %s160
      %p172 = scmp.eq.s32.totalorder %s24, 1
      %p173 = por %p171, %p172
      %p175 = scmp.ne.s32.totalorder %s160, %s174
      %p176 = scmp.eq.s32.totalorder %s24, 0
      %p177 = por %p175, %p176
      %s179 = sadd.s32 %s178, 1
      %p182 = scmp.eq.s32.totalorder %s18, 1
      %p183 = scmp.ne.s32.totalorder %s178, %s180
      %p184 = scmp.eq.s32.totalorder %s18, 0
      %p185 = por %p183, %p184
      %p186 = scmp.ne.s32.totalorder %s178, %s180
      %p187 = scmp.eq.s32.totalorder %s23, 1
      %p188 = por %p186, %p187
      %p189 = scmp.ne.s32.totalorder %s180, %s181
      %p190 = scmp.eq.s32.totalorder %s23, 0
      %p191 = por %p189, %p190
      %p192 = scmp.ne.s32.totalorder %s180, %s181
      %p193 = scmp.eq.s32.totalorder %s24, 1
      %p194 = por %p192, %p193
      %p196 = scmp.ne.s32.totalorder %s181, %s195
      %p197 = scmp.eq.s32.totalorder %s24, 0
      %p198 = por %p196, %p197
      %s199 = ssub.s32 %s18, %s25
      %p200 = scmp.eq.s32.totalorder %s199, 0
      %s202 = sadd.s32 %s201, 1
      %s203 = scalar_select %p200, %s201, %s202
      %p206 = pneg %p200
      %p207 = scmp.eq.s32.totalorder %s18, 1
      %p208 = por %p206, %p207
      %p209 = scmp.ne.s32.totalorder %s201, %s204
      %p210 = scmp.eq.s32.totalorder %s18, 0
      %p211 = por %p209, %p210
      %p212 = scmp.ne.s32.totalorder %s201, %s204
      %p213 = scmp.eq.s32.totalorder %s23, 1
      %p214 = por %p212, %p213
      %p215 = scmp.ne.s32.totalorder %s204, %s205
      %p216 = scmp.eq.s32.totalorder %s23, 0
      %p217 = por %p215, %p216
      %p218 = scmp.ne.s32.totalorder %s204, %s205
      %p219 = scmp.eq.s32.totalorder %s24, 1
      %p220 = por %p218, %p219
      %p222 = scmp.ne.s32.totalorder %s205, %s221
      %p223 = scmp.eq.s32.totalorder %s24, 0
      %p224 = por %p222, %p223
      %p225 = scmp.le.s32.totalorder 1, %s18
      %p226 = scmp.lt.s32.totalorder %s18, 3
      %p227 = pnand %p225, %p226
      %p228 = pneg %p227
      // Predicated region
      $region9: #{tpu_custom_call.1} parent=5 // pred_check
        _
      $region10: #{tpu_custom_call.1} parent=5 // pred_check_branch
        %230 = sbr.rel (%p227) target = $region12
      $region11: #{tpu_custom_call.1} parent=5 // pred_region
        %s231 = ssub.s32 %s18, 1
        // Predicated region
        $region13: #{tpu_custom_call.1} parent=11 // pred_check
          %p232 = pneg %p65
        $region14: #{tpu_custom_call.1} parent=11 // pred_check_branch
          %234 = sbr.rel (%p232) target = $region16
        $region15: #{tpu_custom_call.1} parent=11 // pred_region
          %s236 = ssub.s32 1280, 1280
          %237 = vsyncadd [#allocation4], %s236
          %s238 = sshll.u32 [#allocation3], 4
          %s239 = int_to_ptr.vmem [resolvable:$true] %s238
          %244 = dma.hbm_to_vmem [thread:$0]  %s1, 1280, %s239, [#allocation4], 64, 64, 4
        $region16: #{tpu_custom_call.1} parent=11 // pred_fallthru
          _
        // Predicated region
        $region17: #{tpu_custom_call.1} parent=11 // pred_check
          %p245 = pneg %p86
        $region18: #{tpu_custom_call.1} parent=11 // pred_check_branch
          %247 = sbr.rel (%p245) target = $region20
        $region19: #{tpu_custom_call.1} parent=11 // pred_region
          _
        $region20: #{tpu_custom_call.1} parent=11 // pred_fallthru
          _
        // Predicated region
        $region21: #{tpu_custom_call.1} parent=11 // pred_check
          %p248 = pneg %p107
        $region22: #{tpu_custom_call.1} parent=11 // pred_check_branch
          %250 = sbr.rel (%p248) target = $region24
        $region23: #{tpu_custom_call.1} parent=11 // pred_region
          %s252 = ssub.s32 1280, 1280
          %253 = vsyncadd [#allocation6], %s252
          %s254 = sshll.u32 [#allocation5], 4
          %s255 = int_to_ptr.vmem [resolvable:$true] %s254
          %260 = dma.hbm_to_vmem [thread:$0]  %s3, 1280, %s255, [#allocation6], 64, 64, 4
        $region24: #{tpu_custom_call.1} parent=11 // pred_fallthru
          _
        // Predicated region
        $region25: #{tpu_custom_call.1} parent=11 // pred_check
          %p261 = pneg %p128
        $region26: #{tpu_custom_call.1} parent=11 // pred_check_branch
          %263 = sbr.rel (%p261) target = $region28
        $region27: #{tpu_custom_call.1} parent=11 // pred_region
          %s265 = ssub.s32 1280, 1280
          %266 = vsyncadd [#allocation6], %s265
          %s267 = sshll.u32 [#allocation7], 4
          %s268 = int_to_ptr.vmem [resolvable:$true] %s267
          %273 = dma.hbm_to_vmem [thread:$0]  %s4, 1280, %s268, [#allocation6], 64, 64, 4
        $region28: #{tpu_custom_call.1} parent=11 // pred_fallthru
          _
        // Predicated region
        $region29: #{tpu_custom_call.1} parent=11 // pred_check
          %p274 = pneg %p149
        $region30: #{tpu_custom_call.1} parent=11 // pred_check_branch
          %276 = sbr.rel (%p274) target = $region32
        $region31: #{tpu_custom_call.1} parent=11 // pred_region
          _
        $region32: #{tpu_custom_call.1} parent=11 // pred_fallthru
          _
        // Predicated region
        $region33: #{tpu_custom_call.1} parent=11 // pred_check
          %p277 = pneg %p170
        $region34: #{tpu_custom_call.1} parent=11 // pred_check_branch
          %279 = sbr.rel (%p277) target = $region36
        $region35: #{tpu_custom_call.1} parent=11 // pred_region
          _
        $region36: #{tpu_custom_call.1} parent=11 // pred_fallthru
          _
        // Predicated region
        $region37: #{tpu_custom_call.1} parent=11 // pred_check
          %p280 = pneg %p191
        $region38: #{tpu_custom_call.1} parent=11 // pred_check_branch
          %282 = sbr.rel (%p280) target = $region40
        $region39: #{tpu_custom_call.1} parent=11 // pred_region
          _
        $region40: #{tpu_custom_call.1} parent=11 // pred_fallthru
          _
      $region12: #{tpu_custom_call.1} parent=5 // pred_fallthru
        _
      %p283 = scmp.lt.s32.totalorder %s18, 2
      // Predicated region
      $region41: #{tpu_custom_call.1} parent=5 // pred_check
        %p284 = pneg %p283
      $region42: #{tpu_custom_call.1} parent=5 // pred_check_branch
        %286 = sbr.rel (%p284) target = $region44
      $region43: #{tpu_custom_call.1} parent=5 // pred_region
        // Predicated region
        $region45: #{tpu_custom_call.1} parent=43 // pred_check
          %p287 = pneg %p38
        $region46: #{tpu_custom_call.1} parent=43 // pred_check_branch
          %289 = sbr.rel (%p287) target = $region48
        $region47: #{tpu_custom_call.1} parent=43 // pred_region
          %p290 = scmp.lt.s32.totalorder %s18, 1
          %s291 = scalar_select %p290, %s18, 1
          %s292 = smul.addr %s291, 4
          %s293 = scalar_lea.vmem %s0, %s292
        $region48: #{tpu_custom_call.1} parent=43 // pred_fallthru
          _
      $region44: #{tpu_custom_call.1} parent=5 // pred_fallthru
        _
      %p294 = scmp.le.s32.totalorder 1, %s18
      %p295 = scmp.lt.s32.totalorder %s18, 3
      %p296 = pnand %p294, %p295
      %p297 = pneg %p296
      // Predicated region
      $region49: #{tpu_custom_call.1} parent=5 // pred_check
        _
      $region50: #{tpu_custom_call.1} parent=5 // pred_check_branch
        %299 = sbr.rel (%p296) target = $region52
      $region51: #{tpu_custom_call.1} parent=5 // pred_region
        %s300 = ssub.s32 %s18, 1
        // Predicated region
        $region53: #{tpu_custom_call.1} parent=51 // pred_check
          %p301 = pneg %p65
        $region54: #{tpu_custom_call.1} parent=51 // pred_check_branch
          %303 = sbr.rel (%p301) target = $region56
        $region55: #{tpu_custom_call.1} parent=51 // pred_region
          %304 = dma.done [#allocation4], 1280
        $region56: #{tpu_custom_call.1} parent=51 // pred_fallthru
          _
        // Predicated region
        $region57: #{tpu_custom_call.1} parent=51 // pred_check
          %p305 = pneg %p107
        $region58: #{tpu_custom_call.1} parent=51 // pred_check_branch
          %307 = sbr.rel (%p305) target = $region60
        $region59: #{tpu_custom_call.1} parent=51 // pred_region
          %308 = dma.done [#allocation6], 1280
        $region60: #{tpu_custom_call.1} parent=51 // pred_fallthru
          _
        // Predicated region
        $region61: #{tpu_custom_call.1} parent=51 // pred_check
          %p309 = pneg %p128
        $region62: #{tpu_custom_call.1} parent=51 // pred_check_branch
          %311 = sbr.rel (%p309) target = $region64
        $region63: #{tpu_custom_call.1} parent=51 // pred_region
          %312 = dma.done [#allocation6], 1280
        $region64: #{tpu_custom_call.1} parent=51 // pred_fallthru
          _
        %p313 = scmp.lt.s32.totalorder %s23, 1
        %s314 = scalar_select %p313, %s23, 1
        %s315 = smul.addr %s314, 4
        %s316 = scalar_lea.vmem %s0, %s315
        %p317 = pneg %p44
        %p318 = pneg %p41
        %p319 = pneg %p65
        %p320 = pneg %p62
        %p321 = pneg %p86
        %p322 = pneg %p83
        %p323 = pneg %p107
        %p324 = pneg %p104
        %p325 = pneg %p128
        %p326 = pneg %p125
        %p327 = pneg %p149
        %p328 = pneg %p146
        %p329 = pneg %p170
        %p330 = pneg %p167
        %p331 = pneg %p191
        %p332 = pneg %p188
        %p333 = pneg %p217
        %p334 = pneg %p214
        %p335 = scmp.lt.s32.totalorder %s23, 1
        %s336 = scalar_select %p335, %s23, 1
        %s337 = smul.addr %s336, 8
        %s338 = scalar_lea.vmem %s8, %s337
        %p339 = scmp.lt.s32.totalorder %s23, 1
        %s340 = scalar_select %p339, %s23, 1
        %s341 = smul.addr %s340, 4
        %s342 = scalar_lea.vmem %s0, %s341
        %p343 = scmp.lt.s32.totalorder %s23, 1
        %s344 = scalar_select %p343, %s23, 1
        %s345 = smul.addr %s344, 8
        %s346 = scalar_lea.vmem %s8, %s345
        %v348 = vld [vmem:[%s342] sm:$0xf]
        %v349 = vunpack.c.l.bf16 %v348
        %v350 = vld [vmem:[#allocation3] sm:$0xf]
        %v351 = vld [vmem:[#allocation3 + $0x4] sm:$0xf]
        %v352 = vld [vmem:[#allocation3 + $0x8] sm:$0xf]
        %v353 = vld [vmem:[#allocation3 + $0xc] sm:$0xf]
        %v354 = vld [vmem:[%s2] sm:$0x1]
        %v356 = vlaneseq
        %v357 = vshrl.u32 %v356, 7
        %v358 = vsub.s32 0, %v357
        %v359 = vrot.slane %v354, %v358
        %v365 = vunpack.c.l.b16 %v350
        %v366 = vunpack.c.l.b16 %v351
        %v367 = vunpack.c.l.b16 %v352
        %v368 = vunpack.c.l.b16 %v353
        %v369 = vpack.c.b16 %v366, %v365
        %v370 = vpack.c.b16 %v368, %v367
        %vm373 = vcmask 261120
        %v375 = vsel %vm373, %v348, 0
        %377 = vmatprep.subr.bf16.mxu0 0
        %378 = vmatpush1.bf16.msra.mxu0 0
        %379 = vmatprep.subr.bf16.mxu0 0
        %380 = vmatpush1.bf16.msra.mxu0 0
        %381 = vmatprep.subr.bf16.mxu0 0
        %382 = vmatpush1.bf16.msra.mxu0 0
        %383 = vmatprep.subr.bf16.mxu0 0
        %384 = vmatpush1.bf16.msra.mxu0 0
        %385 = vmatprep.subr.bf16.mxu0 0
        %386 = vmatpush1.bf16.msra.mxu0 0
        %387 = vmatprep.subr.bf16.mxu0 0
        %388 = vmatpush1.bf16.msra.mxu0 0
        %389 = vmatprep.subr.bf16.mxu0 0
        %390 = vmatpush1.bf16.msra.mxu0 %v370
        %391 = vmatprep.subr.bf16.mxu0 0
        %392 = vmatpush1.bf16.msra.mxu0 %v369
        %393 = vmatprep.subr.bf16.mxu0 0
        %394 = vmatpush2.bf16.msra.mxu0 0
        %395 = vmatprep.subr.bf16.mxu0 0
        %396 = vmatpush2.bf16.msra.mxu0 0
        %397 = vmatprep.subr.bf16.mxu0 0
        %398 = vmatpush2.bf16.msra.mxu0 0
        %399 = vmatprep.subr.bf16.mxu0 0
        %400 = vmatpush2.bf16.msra.mxu0 0
        %401 = vmatprep.subr.bf16.mxu0 0
        %402 = vmatpush2.bf16.msra.mxu0 0
        %403 = vmatprep.subr.bf16.mxu0 0
        %404 = vmatpush2.bf16.msra.mxu0 0
        %405 = vmatprep.subr.bf16.mxu0 0
        %406 = vmatpush2.bf16.msra.mxu0 0
        %407 = vmatprep.subr.bf16.mxu0 0
        %408 = vmatpush2.bf16.msra.mxu0 0
        %409 = vmatprep.mubr.bf16.mxu0 0
        %410 = vmatmul.mubr.bf16.gmra.mxu0 %v375
        %v411 = vpop.f32.mrf.mxu0
        %v412 = vadd.f32 %v359, %v411
        %v413 = vpop.f32.mrf.mxu0
        %v414 = vpop.f32.mrf.mxu0
        %v415 = vpop.f32.mrf.mxu0
        %416 = vdwg.mxu0
        %v417 = vxor.u32 %v412, 2147483648
        %v418 = vmul.f32 %v417, 1.442695
        %v419 = vpow.pop %v418
        %v420 = vadd.f32 %v419, 1.0
        %v421 = vrcp.pop %v420
        %v422 = vmul.f32 1.0, %v421
        %v423 = vmul.f32 %v349, %v422
        %v424 = vld [vmem:[#allocation5] sm:$0xf]
        %v425 = vld [vmem:[#allocation5 + $0x4] sm:$0xf]
        %v426 = vld [vmem:[#allocation5 + $0x8] sm:$0xf]
        %v427 = vld [vmem:[#allocation5 + $0xc] sm:$0xf]
        %v428 = vpack.c.bf16 %v423, %v423
        %v429 = vld [vmem:[#allocation7] sm:$0xf]
        %v430 = vld [vmem:[#allocation7 + $0x4] sm:$0xf]
        %v431 = vld [vmem:[#allocation7 + $0x8] sm:$0xf]
        %v432 = vld [vmem:[#allocation7 + $0xc] sm:$0xf]
        %v437 = vunpack.c.l.b16 %v429
        %v438 = vunpack.c.l.b16 %v430
        %v439 = vunpack.c.l.b16 %v431
        %v440 = vunpack.c.l.b16 %v432
        %v441 = vpack.c.b16 %v438, %v437
        %v442 = vpack.c.b16 %v440, %v439
        %v446 = vsel %vm373, %v428, 0
        %448 = vmatprep.subr.bf16.mxu0 0
        %449 = vmatpush1.bf16.msra.mxu0 0
        %450 = vmatprep.subr.bf16.mxu0 0
        %451 = vmatpush1.bf16.msra.mxu0 0
        %452 = vmatprep.subr.bf16.mxu0 0
        %453 = vmatpush1.bf16.msra.mxu0 0
        %454 = vmatprep.subr.bf16.mxu0 0
        %455 = vmatpush1.bf16.msra.mxu0 0
        %456 = vmatprep.subr.bf16.mxu0 0
        %457 = vmatpush1.bf16.msra.mxu0 0
        %458 = vmatprep.subr.bf16.mxu0 0
        %459 = vmatpush1.bf16.msra.mxu0 0
        %460 = vmatprep.subr.bf16.mxu0 0
        %461 = vmatpush1.bf16.msra.mxu0 %v442
        %462 = vmatprep.subr.bf16.mxu0 0
        %463 = vmatpush1.bf16.msra.mxu0 %v441
        %464 = vmatprep.subr.bf16.mxu0 0
        %465 = vmatpush2.bf16.msra.mxu0 0
        %466 = vmatprep.subr.bf16.mxu0 0
        %467 = vmatpush2.bf16.msra.mxu0 0
        %468 = vmatprep.subr.bf16.mxu0 0
        %469 = vmatpush2.bf16.msra.mxu0 0
        %470 = vmatprep.subr.bf16.mxu0 0
        %471 = vmatpush2.bf16.msra.mxu0 0
        %472 = vmatprep.subr.bf16.mxu0 0
        %473 = vmatpush2.bf16.msra.mxu0 0
        %474 = vmatprep.subr.bf16.mxu0 0
        %475 = vmatpush2.bf16.msra.mxu0 0
        %476 = vmatprep.subr.bf16.mxu0 0
        %477 = vmatpush2.bf16.msra.mxu0 0
        %478 = vmatprep.subr.bf16.mxu0 0
        %479 = vmatpush2.bf16.msra.mxu0 0
        %480 = vmatprep.mubr.bf16.mxu0 0
        %481 = vmatmul.mubr.bf16.gmra.mxu0 %v446
        %v482 = vpop.f32.mrf.mxu0
        %v483 = vadd.f32 0.0, %v482
        %v484 = vpop.f32.mrf.mxu0
        %v485 = vpop.f32.mrf.mxu0
        %v486 = vpop.f32.mrf.mxu0
        %487 = vdwg.mxu0
        %v492 = vunpack.c.l.b16 %v424
        %v493 = vunpack.c.l.b16 %v425
        %v494 = vunpack.c.l.b16 %v426
        %v495 = vunpack.c.l.b16 %v427
        %v496 = vpack.c.b16 %v493, %v492
        %v497 = vpack.c.b16 %v495, %v494
        %500 = vmatprep.subr.bf16.mxu0 0
        %501 = vmatpush1.bf16.msra.mxu0 0
        %502 = vmatprep.subr.bf16.mxu0 0
        %503 = vmatpush1.bf16.msra.mxu0 0
        %504 = vmatprep.subr.bf16.mxu0 0
        %505 = vmatpush1.bf16.msra.mxu0 0
        %506 = vmatprep.subr.bf16.mxu0 0
        %507 = vmatpush1.bf16.msra.mxu0 0
        %508 = vmatprep.subr.bf16.mxu0 0
        %509 = vmatpush1.bf16.msra.mxu0 0
        %510 = vmatprep.subr.bf16.mxu0 0
        %511 = vmatpush1.bf16.msra.mxu0 0
        %512 = vmatprep.subr.bf16.mxu0 0
        %513 = vmatpush1.bf16.msra.mxu0 %v497
        %514 = vmatprep.subr.bf16.mxu0 0
        %515 = vmatpush1.bf16.msra.mxu0 %v496
        %516 = vmatprep.subr.bf16.mxu0 0
        %517 = vmatpush2.bf16.msra.mxu0 0
        %518 = vmatprep.subr.bf16.mxu0 0
        %519 = vmatpush2.bf16.msra.mxu0 0
        %520 = vmatprep.subr.bf16.mxu0 0
        %521 = vmatpush2.bf16.msra.mxu0 0
        %522 = vmatprep.subr.bf16.mxu0 0
        %523 = vmatpush2.bf16.msra.mxu0 0
        %524 = vmatprep.subr.bf16.mxu0 0
        %525 = vmatpush2.bf16.msra.mxu0 0
        %526 = vmatprep.subr.bf16.mxu0 0
        %527 = vmatpush2.bf16.msra.mxu0 0
        %528 = vmatprep.subr.bf16.mxu0 0
        %529 = vmatpush2.bf16.msra.mxu0 0
        %530 = vmatprep.subr.bf16.mxu0 0
        %531 = vmatpush2.bf16.msra.mxu0 0
        %532 = vmatprep.mubr.bf16.mxu0 0
        %533 = vmatmul.mubr.bf16.gmra.mxu0 %v375
        %v534 = vpop.f32.mrf.mxu0
        %v535 = vadd.f32 %v483, %v534
        %v536 = vpop.f32.mrf.mxu0
        %v537 = vpop.f32.mrf.mxu0
        %v538 = vpop.f32.mrf.mxu0
        %539 = vdwg.mxu0
        %v540 = vld [vmem:[%s5] sm:$0x1]
        %v542 = vlaneseq
        %v543 = vshrl.u32 %v542, 7
        %v544 = vsub.s32 0, %v543
        %v545 = vrot.slane %v540, %v544
        %v547 = vadd.f32 %v535, %v545
        %v548 = vadd.f32 %v349, %v547
        %v549 = vpack.c.bf16 %v548, %v548
        %s550 = scalar_lea.vmem [#allocation3], 16
        %v551 = vld [vmem:[%s550] sm:$0xf]
        %v552 = vld [vmem:[%s550 + $0x4] sm:$0xf]
        %v553 = vld [vmem:[%s550 + $0x8] sm:$0xf]
        %v554 = vld [vmem:[%s550 + $0xc] sm:$0xf]
        %s555 = scalar_lea.vmem %s2, 1
        %v556 = vld [vmem:[%s555] sm:$0x1]
        %v558 = vlaneseq
        %v559 = vshrl.u32 %v558, 7
        %v560 = vsub.s32 0, %v559
        %v561 = vrot.slane %v556, %v560
        %v567 = vunpack.c.l.b16 %v551
        %v568 = vunpack.c.l.b16 %v552
        %v569 = vunpack.c.l.b16 %v553
        %v570 = vunpack.c.l.b16 %v554
        %v571 = vpack.c.b16 %v568, %v567
        %v572 = vpack.c.b16 %v570, %v569
        %v576 = vsel %vm373, %v549, 0
        %578 = vmatprep.subr.bf16.mxu0 0
        %579 = vmatpush1.bf16.msra.mxu0 0
        %580 = vmatprep.subr.bf16.mxu0 0
        %581 = vmatpush1.bf16.msra.mxu0 0
        %582 = vmatprep.subr.bf16.mxu0 0
        %583 = vmatpush1.bf16.msra.mxu0 0
        %584 = vmatprep.subr.bf16.mxu0 0
        %585 = vmatpush1.bf16.msra.mxu0 0
        %586 = vmatprep.subr.bf16.mxu0 0
        %587 = vmatpush1.bf16.msra.mxu0 0
        %588 = vmatprep.subr.bf16.mxu0 0
        %589 = vmatpush1.bf16.msra.mxu0 0
        %590 = vmatprep.subr.bf16.mxu0 0
        %591 = vmatpush1.bf16.msra.mxu0 %v572
        %592 = vmatprep.subr.bf16.mxu0 0
        %593 = vmatpush1.bf16.msra.mxu0 %v571
        %594 = vmatprep.subr.bf16.mxu0 0
        %595 = vmatpush2.bf16.msra.mxu0 0
        %596 = vmatprep.subr.bf16.mxu0 0
        %597 = vmatpush2.bf16.msra.mxu0 0
        %598 = vmatprep.subr.bf16.mxu0 0
        %599 = vmatpush2.bf16.msra.mxu0 0
        %600 = vmatprep.subr.bf16.mxu0 0
        %601 = vmatpush2.bf16.msra.mxu0 0
        %602 = vmatprep.subr.bf16.mxu0 0
        %603 = vmatpush2.bf16.msra.mxu0 0
        %604 = vmatprep.subr.bf16.mxu0 0
        %605 = vmatpush2.bf16.msra.mxu0 0
        %606 = vmatprep.subr.bf16.mxu0 0
        %607 = vmatpush2.bf16.msra.mxu0 0
        %608 = vmatprep.subr.bf16.mxu0 0
        %609 = vmatpush2.bf16.msra.mxu0 0
        %610 = vmatprep.mubr.bf16.mxu0 0
        %611 = vmatmul.mubr.bf16.gmra.mxu0 %v576
        %v612 = vpop.f32.mrf.mxu0
        %v613 = vadd.f32 %v561, %v612
        %v614 = vpop.f32.mrf.mxu0
        %v615 = vpop.f32.mrf.mxu0
        %v616 = vpop.f32.mrf.mxu0
        %617 = vdwg.mxu0
        %v618 = vxor.u32 %v613, 2147483648
        %v619 = vmul.f32 %v618, 1.442695
        %v620 = vpow.pop %v619
        %v621 = vadd.f32 %v620, 1.0
        %v622 = vrcp.pop %v621
        %v623 = vmul.f32 1.0, %v622
        %v624 = vmul.f32 %v548, %v623
        %s625 = scalar_lea.vmem [#allocation5], 16
        %v626 = vld [vmem:[%s625] sm:$0xf]
        %v627 = vld [vmem:[%s625 + $0x4] sm:$0xf]
        %v628 = vld [vmem:[%s625 + $0x8] sm:$0xf]
        %v629 = vld [vmem:[%s625 + $0xc] sm:$0xf]
        %v630 = vpack.c.bf16 %v624, %v624
        %s631 = scalar_lea.vmem [#allocation7], 16
        %v632 = vld [vmem:[%s631] sm:$0xf]
        %v633 = vld [vmem:[%s631 + $0x4] sm:$0xf]
        %v634 = vld [vmem:[%s631 + $0x8] sm:$0xf]
        %v635 = vld [vmem:[%s631 + $0xc] sm:$0xf]
        %v640 = vunpack.c.l.b16 %v632
        %v641 = vunpack.c.l.b16 %v633
        %v642 = vunpack.c.l.b16 %v634
        %v643 = vunpack.c.l.b16 %v635
        %v644 = vpack.c.b16 %v641, %v640
        %v645 = vpack.c.b16 %v643, %v642
        %v649 = vsel %vm373, %v630, 0
        %651 = vmatprep.subr.bf16.mxu0 0
        %652 = vmatpush1.bf16.msra.mxu0 0
        %653 = vmatprep.subr.bf16.mxu0 0
        %654 = vmatpush1.bf16.msra.mxu0 0
        %655 = vmatprep.subr.bf16.mxu0 0
        %656 = vmatpush1.bf16.msra.mxu0 0
        %657 = vmatprep.subr.bf16.mxu0 0
        %658 = vmatpush1.bf16.msra.mxu0 0
        %659 = vmatprep.subr.bf16.mxu0 0
        %660 = vmatpush1.bf16.msra.mxu0 0
        %661 = vmatprep.subr.bf16.mxu0 0
        %662 = vmatpush1.bf16.msra.mxu0 0
        %663 = vmatprep.subr.bf16.mxu0 0
        %664 = vmatpush1.bf16.msra.mxu0 %v645
        %665 = vmatprep.subr.bf16.mxu0 0
        %666 = vmatpush1.bf16.msra.mxu0 %v644
        %667 = vmatprep.subr.bf16.mxu0 0
        %668 = vmatpush2.bf16.msra.mxu0 0
        %669 = vmatprep.subr.bf16.mxu0 0
        %670 = vmatpush2.bf16.msra.mxu0 0
        %671 = vmatprep.subr.bf16.mxu0 0
        %672 = vmatpush2.bf16.msra.mxu0 0
        %673 = vmatprep.subr.bf16.mxu0 0
        %674 = vmatpush2.bf16.msra.mxu0 0
        %675 = vmatprep.subr.bf16.mxu0 0
        %676 = vmatpush2.bf16.msra.mxu0 0
        %677 = vmatprep.subr.bf16.mxu0 0
        %678 = vmatpush2.bf16.msra.mxu0 0
        %679 = vmatprep.subr.bf16.mxu0 0
        %680 = vmatpush2.bf16.msra.mxu0 0
        %681 = vmatprep.subr.bf16.mxu0 0
        %682 = vmatpush2.bf16.msra.mxu0 0
        %683 = vmatprep.mubr.bf16.mxu0 0
        %684 = vmatmul.mubr.bf16.gmra.mxu0 %v649
        %v685 = vpop.f32.mrf.mxu0
        %v686 = vadd.f32 0.0, %v685
        %v687 = vpop.f32.mrf.mxu0
        %v688 = vpop.f32.mrf.mxu0
        %v689 = vpop.f32.mrf.mxu0
        %690 = vdwg.mxu0
        %v695 = vunpack.c.l.b16 %v626
        %v696 = vunpack.c.l.b16 %v627
        %v697 = vunpack.c.l.b16 %v628
        %v698 = vunpack.c.l.b16 %v629
        %v699 = vpack.c.b16 %v696, %v695
        %v700 = vpack.c.b16 %v698, %v697
        %703 = vmatprep.subr.bf16.mxu0 0
        %704 = vmatpush1.bf16.msra.mxu0 0
        %705 = vmatprep.subr.bf16.mxu0 0
        %706 = vmatpush1.bf16.msra.mxu0 0
        %707 = vmatprep.subr.bf16.mxu0 0
        %708 = vmatpush1.bf16.msra.mxu0 0
        %709 = vmatprep.subr.bf16.mxu0 0
        %710 = vmatpush1.bf16.msra.mxu0 0
        %711 = vmatprep.subr.bf16.mxu0 0
        %712 = vmatpush1.bf16.msra.mxu0 0
        %713 = vmatprep.subr.bf16.mxu0 0
        %714 = vmatpush1.bf16.msra.mxu0 0
        %715 = vmatprep.subr.bf16.mxu0 0
        %716 = vmatpush1.bf16.msra.mxu0 %v700
        %717 = vmatprep.subr.bf16.mxu0 0
        %718 = vmatpush1.bf16.msra.mxu0 %v699
        %719 = vmatprep.subr.bf16.mxu0 0
        %720 = vmatpush2.bf16.msra.mxu0 0
        %721 = vmatprep.subr.bf16.mxu0 0
        %722 = vmatpush2.bf16.msra.mxu0 0
        %723 = vmatprep.subr.bf16.mxu0 0
        %724 = vmatpush2.bf16.msra.mxu0 0
        %725 = vmatprep.subr.bf16.mxu0 0
        %726 = vmatpush2.bf16.msra.mxu0 0
        %727 = vmatprep.subr.bf16.mxu0 0
        %728 = vmatpush2.bf16.msra.mxu0 0
        %729 = vmatprep.subr.bf16.mxu0 0
        %730 = vmatpush2.bf16.msra.mxu0 0
        %731 = vmatprep.subr.bf16.mxu0 0
        %732 = vmatpush2.bf16.msra.mxu0 0
        %733 = vmatprep.subr.bf16.mxu0 0
        %734 = vmatpush2.bf16.msra.mxu0 0
        %735 = vmatprep.mubr.bf16.mxu0 0
        %736 = vmatmul.mubr.bf16.gmra.mxu0 %v576
        %v737 = vpop.f32.mrf.mxu0
        %v738 = vadd.f32 %v686, %v737
        %v739 = vpop.f32.mrf.mxu0
        %v740 = vpop.f32.mrf.mxu0
        %v741 = vpop.f32.mrf.mxu0
        %742 = vdwg.mxu0
        %s743 = scalar_lea.vmem %s5, 1
        %v744 = vld [vmem:[%s743] sm:$0x1]
        %v746 = vlaneseq
        %v747 = vshrl.u32 %v746, 7
        %v748 = vsub.s32 0, %v747
        %v749 = vrot.slane %v744, %v748
        %v751 = vadd.f32 %v738, %v749
        %v752 = vadd.f32 %v548, %v751
        %v753 = vpack.c.bf16 %v752, %v752
        %s754 = scalar_lea.vmem [#allocation3], 32
        %v755 = vld [vmem:[%s754] sm:$0xf]
        %v756 = vld [vmem:[%s754 + $0x4] sm:$0xf]
        %v757 = vld [vmem:[%s754 + $0x8] sm:$0xf]
        %v758 = vld [vmem:[%s754 + $0xc] sm:$0xf]
        %s759 = scalar_lea.vmem %s2, 2
        %v760 = vld [vmem:[%s759] sm:$0x1]
        %v762 = vlaneseq
        %v763 = vshrl.u32 %v762, 7
        %v764 = vsub.s32 0, %v763
        %v765 = vrot.slane %v760, %v764
        %v771 = vunpack.c.l.b16 %v755
        %v772 = vunpack.c.l.b16 %v756
        %v773 = vunpack.c.l.b16 %v757
        %v774 = vunpack.c.l.b16 %v758
        %v775 = vpack.c.b16 %v772, %v771
        %v776 = vpack.c.b16 %v774, %v773
        %v780 = vsel %vm373, %v753, 0
        %782 = vmatprep.subr.bf16.mxu0 0
        %783 = vmatpush1.bf16.msra.mxu0 0
        %784 = vmatprep.subr.bf16.mxu0 0
        %785 = vmatpush1.bf16.msra.mxu0 0
        %786 = vmatprep.subr.bf16.mxu0 0
        %787 = vmatpush1.bf16.msra.mxu0 0
        %788 = vmatprep.subr.bf16.mxu0 0
        %789 = vmatpush1.bf16.msra.mxu0 0
        %790 = vmatprep.subr.bf16.mxu0 0
        %791 = vmatpush1.bf16.msra.mxu0 0
        %792 = vmatprep.subr.bf16.mxu0 0
        %793 = vmatpush1.bf16.msra.mxu0 0
        %794 = vmatprep.subr.bf16.mxu0 0
        %795 = vmatpush1.bf16.msra.mxu0 %v776
        %796 = vmatprep.subr.bf16.mxu0 0
        %797 = vmatpush1.bf16.msra.mxu0 %v775
        %798 = vmatprep.subr.bf16.mxu0 0
        %799 = vmatpush2.bf16.msra.mxu0 0
        %800 = vmatprep.subr.bf16.mxu0 0
        %801 = vmatpush2.bf16.msra.mxu0 0
        %802 = vmatprep.subr.bf16.mxu0 0
        %803 = vmatpush2.bf16.msra.mxu0 0
        %804 = vmatprep.subr.bf16.mxu0 0
        %805 = vmatpush2.bf16.msra.mxu0 0
        %806 = vmatprep.subr.bf16.mxu0 0
        %807 = vmatpush2.bf16.msra.mxu0 0
        %808 = vmatprep.subr.bf16.mxu0 0
        %809 = vmatpush2.bf16.msra.mxu0 0
        %810 = vmatprep.subr.bf16.mxu0 0
        %811 = vmatpush2.bf16.msra.mxu0 0
        %812 = vmatprep.subr.bf16.mxu0 0
        %813 = vmatpush2.bf16.msra.mxu0 0
        %814 = vmatprep.mubr.bf16.mxu0 0
        %815 = vmatmul.mubr.bf16.gmra.mxu0 %v780
        %v816 = vpop.f32.mrf.mxu0
        %v817 = vadd.f32 %v765, %v816
        %v818 = vpop.f32.mrf.mxu0
        %v819 = vpop.f32.mrf.mxu0
        %v820 = vpop.f32.mrf.mxu0
        %821 = vdwg.mxu0
        %v822 = vxor.u32 %v817, 2147483648
        %v823 = vmul.f32 %v822, 1.442695
        %v824 = vpow.pop %v823
        %v825 = vadd.f32 %v824, 1.0
        %v826 = vrcp.pop %v825
        %v827 = vmul.f32 1.0, %v826
        %v828 = vmul.f32 %v752, %v827
        %s829 = scalar_lea.vmem [#allocation5], 32
        %v830 = vld [vmem:[%s829] sm:$0xf]
        %v831 = vld [vmem:[%s829 + $0x4] sm:$0xf]
        %v832 = vld [vmem:[%s829 + $0x8] sm:$0xf]
        %v833 = vld [vmem:[%s829 + $0xc] sm:$0xf]
        %v834 = vpack.c.bf16 %v828, %v828
        %s835 = scalar_lea.vmem [#allocation7], 32
        %v836 = vld [vmem:[%s835] sm:$0xf]
        %v837 = vld [vmem:[%s835 + $0x4] sm:$0xf]
        %v838 = vld [vmem:[%s835 + $0x8] sm:$0xf]
        %v839 = vld [vmem:[%s835 + $0xc] sm:$0xf]
        %v844 = vunpack.c.l.b16 %v836
        %v845 = vunpack.c.l.b16 %v837
        %v846 = vunpack.c.l.b16 %v838
        %v847 = vunpack.c.l.b16 %v839
        %v848 = vpack.c.b16 %v845, %v844
        %v849 = vpack.c.b16 %v847, %v846
        %v853 = vsel %vm373, %v834, 0
        %855 = vmatprep.subr.bf16.mxu0 0
        %856 = vmatpush1.bf16.msra.mxu0 0
        %857 = vmatprep.subr.bf16.mxu0 0
        %858 = vmatpush1.bf16.msra.mxu0 0
        %859 = vmatprep.subr.bf16.mxu0 0
        %860 = vmatpush1.bf16.msra.mxu0 0
        %861 = vmatprep.subr.bf16.mxu0 0
        %862 = vmatpush1.bf16.msra.mxu0 0
        %863 = vmatprep.subr.bf16.mxu0 0
        %864 = vmatpush1.bf16.msra.mxu0 0
        %865 = vmatprep.subr.bf16.mxu0 0
        %866 = vmatpush1.bf16.msra.mxu0 0
        %867 = vmatprep.subr.bf16.mxu0 0
        %868 = vmatpush1.bf16.msra.mxu0 %v849
        %869 = vmatprep.subr.bf16.mxu0 0
        %870 = vmatpush1.bf16.msra.mxu0 %v848
        %871 = vmatprep.subr.bf16.mxu0 0
        %872 = vmatpush2.bf16.msra.mxu0 0
        %873 = vmatprep.subr.bf16.mxu0 0
        %874 = vmatpush2.bf16.msra.mxu0 0
        %875 = vmatprep.subr.bf16.mxu0 0
        %876 = vmatpush2.bf16.msra.mxu0 0
        %877 = vmatprep.subr.bf16.mxu0 0
        %878 = vmatpush2.bf16.msra.mxu0 0
        %879 = vmatprep.subr.bf16.mxu0 0
        %880 = vmatpush2.bf16.msra.mxu0 0
        %881 = vmatprep.subr.bf16.mxu0 0
        %882 = vmatpush2.bf16.msra.mxu0 0
        %883 = vmatprep.subr.bf16.mxu0 0
        %884 = vmatpush2.bf16.msra.mxu0 0
        %885 = vmatprep.subr.bf16.mxu0 0
        %886 = vmatpush2.bf16.msra.mxu0 0
        %887 = vmatprep.mubr.bf16.mxu0 0
        %888 = vmatmul.mubr.bf16.gmra.mxu0 %v853
        %v889 = vpop.f32.mrf.mxu0
        %v890 = vadd.f32 0.0, %v889
        %v891 = vpop.f32.mrf.mxu0
        %v892 = vpop.f32.mrf.mxu0
        %v893 = vpop.f32.mrf.mxu0
        %894 = vdwg.mxu0
        %v899 = vunpack.c.l.b16 %v830
        %v900 = vunpack.c.l.b16 %v831
        %v901 = vunpack.c.l.b16 %v832
        %v902 = vunpack.c.l.b16 %v833
        %v903 = vpack.c.b16 %v900, %v899
        %v904 = vpack.c.b16 %v902, %v901
        %907 = vmatprep.subr.bf16.mxu0 0
        %908 = vmatpush1.bf16.msra.mxu0 0
        %909 = vmatprep.subr.bf16.mxu0 0
        %910 = vmatpush1.bf16.msra.mxu0 0
        %911 = vmatprep.subr.bf16.mxu0 0
        %912 = vmatpush1.bf16.msra.mxu0 0
        %913 = vmatprep.subr.bf16.mxu0 0
        %914 = vmatpush1.bf16.msra.mxu0 0
        %915 = vmatprep.subr.bf16.mxu0 0
        %916 = vmatpush1.bf16.msra.mxu0 0
        %917 = vmatprep.subr.bf16.mxu0 0
        %918 = vmatpush1.bf16.msra.mxu0 0
        %919 = vmatprep.subr.bf16.mxu0 0
        %920 = vmatpush1.bf16.msra.mxu0 %v904
        %921 = vmatprep.subr.bf16.mxu0 0
        %922 = vmatpush1.bf16.msra.mxu0 %v903
        %923 = vmatprep.subr.bf16.mxu0 0
        %924 = vmatpush2.bf16.msra.mxu0 0
        %925 = vmatprep.subr.bf16.mxu0 0
        %926 = vmatpush2.bf16.msra.mxu0 0
        %927 = vmatprep.subr.bf16.mxu0 0
        %928 = vmatpush2.bf16.msra.mxu0 0
        %929 = vmatprep.subr.bf16.mxu0 0
        %930 = vmatpush2.bf16.msra.mxu0 0
        %931 = vmatprep.subr.bf16.mxu0 0
        %932 = vmatpush2.bf16.msra.mxu0 0
        %933 = vmatprep.subr.bf16.mxu0 0
        %934 = vmatpush2.bf16.msra.mxu0 0
        %935 = vmatprep.subr.bf16.mxu0 0
        %936 = vmatpush2.bf16.msra.mxu0 0
        %937 = vmatprep.subr.bf16.mxu0 0
        %938 = vmatpush2.bf16.msra.mxu0 0
        %939 = vmatprep.mubr.bf16.mxu0 0
        %940 = vmatmul.mubr.bf16.gmra.mxu0 %v780
        %v941 = vpop.f32.mrf.mxu0
        %v942 = vadd.f32 %v890, %v941
        %v943 = vpop.f32.mrf.mxu0
        %v944 = vpop.f32.mrf.mxu0
        %v945 = vpop.f32.mrf.mxu0
        %946 = vdwg.mxu0
        %s947 = scalar_lea.vmem %s5, 2
        %v948 = vld [vmem:[%s947] sm:$0x1]
        %v950 = vlaneseq
        %v951 = vshrl.u32 %v950, 7
        %v952 = vsub.s32 0, %v951
        %v953 = vrot.slane %v948, %v952
        %v955 = vadd.f32 %v942, %v953
        %v956 = vadd.f32 %v752, %v955
        %v957 = vpack.c.bf16 %v956, %v956
        %s958 = scalar_lea.vmem [#allocation3], 48
        %v959 = vld [vmem:[%s958] sm:$0xf]
        %v960 = vld [vmem:[%s958 + $0x4] sm:$0xf]
        %v961 = vld [vmem:[%s958 + $0x8] sm:$0xf]
        %v962 = vld [vmem:[%s958 + $0xc] sm:$0xf]
        %s963 = scalar_lea.vmem %s2, 3
        %v964 = vld [vmem:[%s963] sm:$0x1]
        %v966 = vlaneseq
        %v967 = vshrl.u32 %v966, 7
        %v968 = vsub.s32 0, %v967
        %v969 = vrot.slane %v964, %v968
        %v975 = vunpack.c.l.b16 %v959
        %v976 = vunpack.c.l.b16 %v960
        %v977 = vunpack.c.l.b16 %v961
        %v978 = vunpack.c.l.b16 %v962
        %v979 = vpack.c.b16 %v976, %v975
        %v980 = vpack.c.b16 %v978, %v977
        %v984 = vsel %vm373, %v957, 0
        %986 = vmatprep.subr.bf16.mxu0 0
        %987 = vmatpush1.bf16.msra.mxu0 0
        %988 = vmatprep.subr.bf16.mxu0 0
        %989 = vmatpush1.bf16.msra.mxu0 0
        %990 = vmatprep.subr.bf16.mxu0 0
        %991 = vmatpush1.bf16.msra.mxu0 0
        %992 = vmatprep.subr.bf16.mxu0 0
        %993 = vmatpush1.bf16.msra.mxu0 0
        %994 = vmatprep.subr.bf16.mxu0 0
        %995 = vmatpush1.bf16.msra.mxu0 0
        %996 = vmatprep.subr.bf16.mxu0 0
        %997 = vmatpush1.bf16.msra.mxu0 0
        %998 = vmatprep.subr.bf16.mxu0 0
        %999 = vmatpush1.bf16.msra.mxu0 %v980
        %1000 = vmatprep.subr.bf16.mxu0 0
        %1001 = vmatpush1.bf16.msra.mxu0 %v979
        %1002 = vmatprep.subr.bf16.mxu0 0
        %1003 = vmatpush2.bf16.msra.mxu0 0
        %1004 = vmatprep.subr.bf16.mxu0 0
        %1005 = vmatpush2.bf16.msra.mxu0 0
        %1006 = vmatprep.subr.bf16.mxu0 0
        %1007 = vmatpush2.bf16.msra.mxu0 0
        %1008 = vmatprep.subr.bf16.mxu0 0
        %1009 = vmatpush2.bf16.msra.mxu0 0
        %1010 = vmatprep.subr.bf16.mxu0 0
        %1011 = vmatpush2.bf16.msra.mxu0 0
        %1012 = vmatprep.subr.bf16.mxu0 0
        %1013 = vmatpush2.bf16.msra.mxu0 0
        %1014 = vmatprep.subr.bf16.mxu0 0
        %1015 = vmatpush2.bf16.msra.mxu0 0
        %1016 = vmatprep.subr.bf16.mxu0 0
        %1017 = vmatpush2.bf16.msra.mxu0 0
        %1018 = vmatprep.mubr.bf16.mxu0 0
        %1019 = vmatmul.mubr.bf16.gmra.mxu0 %v984
        %v1020 = vpop.f32.mrf.mxu0
        %v1021 = vadd.f32 %v969, %v1020
        %v1022 = vpop.f32.mrf.mxu0
        %v1023 = vpop.f32.mrf.mxu0
        %v1024 = vpop.f32.mrf.mxu0
        %1025 = vdwg.mxu0
        %v1026 = vxor.u32 %v1021, 2147483648
        %v1027 = vmul.f32 %v1026, 1.442695
        %v1028 = vpow.pop %v1027
        %v1029 = vadd.f32 %v1028, 1.0
        %v1030 = vrcp.pop %v1029
        %v1031 = vmul.f32 1.0, %v1030
        %v1032 = vmul.f32 %v956, %v1031
        %s1033 = scalar_lea.vmem [#allocation5], 48
        %v1034 = vld [vmem:[%s1033] sm:$0xf]
        %v1035 = vld [vmem:[%s1033 + $0x4] sm:$0xf]
        %v1036 = vld [vmem:[%s1033 + $0x8] sm:$0xf]
        %v1037 = vld [vmem:[%s1033 + $0xc] sm:$0xf]
        %v1038 = vpack.c.bf16 %v1032, %v1032
        %s1039 = scalar_lea.vmem [#allocation7], 48
        %v1040 = vld [vmem:[%s1039] sm:$0xf]
        %v1041 = vld [vmem:[%s1039 + $0x4] sm:$0xf]
        %v1042 = vld [vmem:[%s1039 + $0x8] sm:$0xf]
        %v1043 = vld [vmem:[%s1039 + $0xc] sm:$0xf]
        %v1048 = vunpack.c.l.b16 %v1040
        %v1049 = vunpack.c.l.b16 %v1041
        %v1050 = vunpack.c.l.b16 %v1042
        %v1051 = vunpack.c.l.b16 %v1043
        %v1052 = vpack.c.b16 %v1049, %v1048
        %v1053 = vpack.c.b16 %v1051, %v1050
        %v1057 = vsel %vm373, %v1038, 0
        %1059 = vmatprep.subr.bf16.mxu0 0
        %1060 = vmatpush1.bf16.msra.mxu0 0
        %1061 = vmatprep.subr.bf16.mxu0 0
        %1062 = vmatpush1.bf16.msra.mxu0 0
        %1063 = vmatprep.subr.bf16.mxu0 0
        %1064 = vmatpush1.bf16.msra.mxu0 0
        %1065 = vmatprep.subr.bf16.mxu0 0
        %1066 = vmatpush1.bf16.msra.mxu0 0
        %1067 = vmatprep.subr.bf16.mxu0 0
        %1068 = vmatpush1.bf16.msra.mxu0 0
        %1069 = vmatprep.subr.bf16.mxu0 0
        %1070 = vmatpush1.bf16.msra.mxu0 0
        %1071 = vmatprep.subr.bf16.mxu0 0
        %1072 = vmatpush1.bf16.msra.mxu0 %v1053
        %1073 = vmatprep.subr.bf16.mxu0 0
        %1074 = vmatpush1.bf16.msra.mxu0 %v1052
        %1075 = vmatprep.subr.bf16.mxu0 0
        %1076 = vmatpush2.bf16.msra.mxu0 0
        %1077 = vmatprep.subr.bf16.mxu0 0
        %1078 = vmatpush2.bf16.msra.mxu0 0
        %1079 = vmatprep.subr.bf16.mxu0 0
        %1080 = vmatpush2.bf16.msra.mxu0 0
        %1081 = vmatprep.subr.bf16.mxu0 0
        %1082 = vmatpush2.bf16.msra.mxu0 0
        %1083 = vmatprep.subr.bf16.mxu0 0
        %1084 = vmatpush2.bf16.msra.mxu0 0
        %1085 = vmatprep.subr.bf16.mxu0 0
        %1086 = vmatpush2.bf16.msra.mxu0 0
        %1087 = vmatprep.subr.bf16.mxu0 0
        %1088 = vmatpush2.bf16.msra.mxu0 0
        %1089 = vmatprep.subr.bf16.mxu0 0
        %1090 = vmatpush2.bf16.msra.mxu0 0
        %1091 = vmatprep.mubr.bf16.mxu0 0
        %1092 = vmatmul.mubr.bf16.gmra.mxu0 %v1057
        %v1093 = vpop.f32.mrf.mxu0
        %v1094 = vadd.f32 0.0, %v1093
        %v1095 = vpop.f32.mrf.mxu0
        %v1096 = vpop.f32.mrf.mxu0
        %v1097 = vpop.f32.mrf.mxu0
        %1098 = vdwg.mxu0
        %v1103 = vunpack.c.l.b16 %v1034
        %v1104 = vunpack.c.l.b16 %v1035
        %v1105 = vunpack.c.l.b16 %v1036
        %v1106 = vunpack.c.l.b16 %v1037
        %v1107 = vpack.c.b16 %v1104, %v1103
        %v1108 = vpack.c.b16 %v1106, %v1105
        %1111 = vmatprep.subr.bf16.mxu0 0
        %1112 = vmatpush1.bf16.msra.mxu0 0
        %1113 = vmatprep.subr.bf16.mxu0 0
        %1114 = vmatpush1.bf16.msra.mxu0 0
        %1115 = vmatprep.subr.bf16.mxu0 0
        %1116 = vmatpush1.bf16.msra.mxu0 0
        %1117 = vmatprep.subr.bf16.mxu0 0
        %1118 = vmatpush1.bf16.msra.mxu0 0
        %1119 = vmatprep.subr.bf16.mxu0 0
        %1120 = vmatpush1.bf16.msra.mxu0 0
        %1121 = vmatprep.subr.bf16.mxu0 0
        %1122 = vmatpush1.bf16.msra.mxu0 0
        %1123 = vmatprep.subr.bf16.mxu0 0
        %1124 = vmatpush1.bf16.msra.mxu0 %v1108
        %1125 = vmatprep.subr.bf16.mxu0 0
        %1126 = vmatpush1.bf16.msra.mxu0 %v1107
        %1127 = vmatprep.subr.bf16.mxu0 0
        %1128 = vmatpush2.bf16.msra.mxu0 0
        %1129 = vmatprep.subr.bf16.mxu0 0
        %1130 = vmatpush2.bf16.msra.mxu0 0
        %1131 = vmatprep.subr.bf16.mxu0 0
        %1132 = vmatpush2.bf16.msra.mxu0 0
        %1133 = vmatprep.subr.bf16.mxu0 0
        %1134 = vmatpush2.bf16.msra.mxu0 0
        %1135 = vmatprep.subr.bf16.mxu0 0
        %1136 = vmatpush2.bf16.msra.mxu0 0
        %1137 = vmatprep.subr.bf16.mxu0 0
        %1138 = vmatpush2.bf16.msra.mxu0 0
        %1139 = vmatprep.subr.bf16.mxu0 0
        %1140 = vmatpush2.bf16.msra.mxu0 0
        %1141 = vmatprep.subr.bf16.mxu0 0
        %1142 = vmatpush2.bf16.msra.mxu0 0
        %1143 = vmatprep.mubr.bf16.mxu0 0
        %1144 = vmatmul.mubr.bf16.gmra.mxu0 %v984
        %v1145 = vpop.f32.mrf.mxu0
        %v1146 = vadd.f32 %v1094, %v1145
        %v1147 = vpop.f32.mrf.mxu0
        %v1148 = vpop.f32.mrf.mxu0
        %v1149 = vpop.f32.mrf.mxu0
        %1150 = vdwg.mxu0
        %s1151 = scalar_lea.vmem %s5, 3
        %v1152 = vld [vmem:[%s1151] sm:$0x1]
        %v1154 = vlaneseq
        %v1155 = vshrl.u32 %v1154, 7
        %v1156 = vsub.s32 0, %v1155
        %v1157 = vrot.slane %v1152, %v1156
        %v1159 = vadd.f32 %v1146, %v1157
        %v1160 = vadd.f32 %v956, %v1159
        %v1161 = vpack.c.bf16 %v1160, %v1160
        %s1162 = scalar_lea.vmem [#allocation3], 64
        %v1163 = vld [vmem:[%s1162] sm:$0xf]
        %v1164 = vld [vmem:[%s1162 + $0x4] sm:$0xf]
        %v1165 = vld [vmem:[%s1162 + $0x8] sm:$0xf]
        %v1166 = vld [vmem:[%s1162 + $0xc] sm:$0xf]
        %s1167 = scalar_lea.vmem %s2, 4
        %v1168 = vld [vmem:[%s1167] sm:$0x1]
        %v1170 = vlaneseq
        %v1171 = vshrl.u32 %v1170, 7
        %v1172 = vsub.s32 0, %v1171
        %v1173 = vrot.slane %v1168, %v1172
        %v1179 = vunpack.c.l.b16 %v1163
        %v1180 = vunpack.c.l.b16 %v1164
        %v1181 = vunpack.c.l.b16 %v1165
        %v1182 = vunpack.c.l.b16 %v1166
        %v1183 = vpack.c.b16 %v1180, %v1179
        %v1184 = vpack.c.b16 %v1182, %v1181
        %v1188 = vsel %vm373, %v1161, 0
        %1190 = vmatprep.subr.bf16.mxu0 0
        %1191 = vmatpush1.bf16.msra.mxu0 0
        %1192 = vmatprep.subr.bf16.mxu0 0
        %1193 = vmatpush1.bf16.msra.mxu0 0
        %1194 = vmatprep.subr.bf16.mxu0 0
        %1195 = vmatpush1.bf16.msra.mxu0 0
        %1196 = vmatprep.subr.bf16.mxu0 0
        %1197 = vmatpush1.bf16.msra.mxu0 0
        %1198 = vmatprep.subr.bf16.mxu0 0
        %1199 = vmatpush1.bf16.msra.mxu0 0
        %1200 = vmatprep.subr.bf16.mxu0 0
        %1201 = vmatpush1.bf16.msra.mxu0 0
        %1202 = vmatprep.subr.bf16.mxu0 0
        %1203 = vmatpush1.bf16.msra.mxu0 %v1184
        %1204 = vmatprep.subr.bf16.mxu0 0
        %1205 = vmatpush1.bf16.msra.mxu0 %v1183
        %1206 = vmatprep.subr.bf16.mxu0 0
        %1207 = vmatpush2.bf16.msra.mxu0 0
        %1208 = vmatprep.subr.bf16.mxu0 0
        %1209 = vmatpush2.bf16.msra.mxu0 0
        %1210 = vmatprep.subr.bf16.mxu0 0
        %1211 = vmatpush2.bf16.msra.mxu0 0
        %1212 = vmatprep.subr.bf16.mxu0 0
        %1213 = vmatpush2.bf16.msra.mxu0 0
        %1214 = vmatprep.subr.bf16.mxu0 0
        %1215 = vmatpush2.bf16.msra.mxu0 0
        %1216 = vmatprep.subr.bf16.mxu0 0
        %1217 = vmatpush2.bf16.msra.mxu0 0
        %1218 = vmatprep.subr.bf16.mxu0 0
        %1219 = vmatpush2.bf16.msra.mxu0 0
        %1220 = vmatprep.subr.bf16.mxu0 0
        %1221 = vmatpush2.bf16.msra.mxu0 0
        %1222 = vmatprep.mubr.bf16.mxu0 0
        %1223 = vmatmul.mubr.bf16.gmra.mxu0 %v1188
        %v1224 = vpop.f32.mrf.mxu0
        %v1225 = vadd.f32 %v1173, %v1224
        %v1226 = vpop.f32.mrf.mxu0
        %v1227 = vpop.f32.mrf.mxu0
        %v1228 = vpop.f32.mrf.mxu0
        %1229 = vdwg.mxu0
        %v1230 = vxor.u32 %v1225, 2147483648
        %v1231 = vmul.f32 %v1230, 1.442695
        %v1232 = vpow.pop %v1231
        %v1233 = vadd.f32 %v1232, 1.0
        %v1234 = vrcp.pop %v1233
        %v1235 = vmul.f32 1.0, %v1234
        %v1236 = vmul.f32 %v1160, %v1235
        %s1237 = scalar_lea.vmem [#allocation5], 64
        %v1238 = vld [vmem:[%s1237] sm:$0xf]
        %v1239 = vld [vmem:[%s1237 + $0x4] sm:$0xf]
        %v1240 = vld [vmem:[%s1237 + $0x8] sm:$0xf]
        %v1241 = vld [vmem:[%s1237 + $0xc] sm:$0xf]
        %v1242 = vpack.c.bf16 %v1236, %v1236
        %s1243 = scalar_lea.vmem [#allocation7], 64
        %v1244 = vld [vmem:[%s1243] sm:$0xf]
        %v1245 = vld [vmem:[%s1243 + $0x4] sm:$0xf]
        %v1246 = vld [vmem:[%s1243 + $0x8] sm:$0xf]
        %v1247 = vld [vmem:[%s1243 + $0xc] sm:$0xf]
        %v1252 = vunpack.c.l.b16 %v1244
        %v1253 = vunpack.c.l.b16 %v1245
        %v1254 = vunpack.c.l.b16 %v1246
        %v1255 = vunpack.c.l.b16 %v1247
        %v1256 = vpack.c.b16 %v1253, %v1252
        %v1257 = vpack.c.b16 %v1255, %v1254
        %v1261 = vsel %vm373, %v1242, 0
        %1263 = vmatprep.subr.bf16.mxu0 0
        %1264 = vmatpush1.bf16.msra.mxu0 0
        %1265 = vmatprep.subr.bf16.mxu0 0
        %1266 = vmatpush1.bf16.msra.mxu0 0
        %1267 = vmatprep.subr.bf16.mxu0 0
        %1268 = vmatpush1.bf16.msra.mxu0 0
        %1269 = vmatprep.subr.bf16.mxu0 0
        %1270 = vmatpush1.bf16.msra.mxu0 0
        %1271 = vmatprep.subr.bf16.mxu0 0
        %1272 = vmatpush1.bf16.msra.mxu0 0
        %1273 = vmatprep.subr.bf16.mxu0 0
        %1274 = vmatpush1.bf16.msra.mxu0 0
        %1275 = vmatprep.subr.bf16.mxu0 0
        %1276 = vmatpush1.bf16.msra.mxu0 %v1257
        %1277 = vmatprep.subr.bf16.mxu0 0
        %1278 = vmatpush1.bf16.msra.mxu0 %v1256
        %1279 = vmatprep.subr.bf16.mxu0 0
        %1280 = vmatpush2.bf16.msra.mxu0 0
        %1281 = vmatprep.subr.bf16.mxu0 0
        %1282 = vmatpush2.bf16.msra.mxu0 0
        %1283 = vmatprep.subr.bf16.mxu0 0
        %1284 = vmatpush2.bf16.msra.mxu0 0
        %1285 = vmatprep.subr.bf16.mxu0 0
        %1286 = vmatpush2.bf16.msra.mxu0 0
        %1287 = vmatprep.subr.bf16.mxu0 0
        %1288 = vmatpush2.bf16.msra.mxu0 0
        %1289 = vmatprep.subr.bf16.mxu0 0
        %1290 = vmatpush2.bf16.msra.mxu0 0
        %1291 = vmatprep.subr.bf16.mxu0 0
        %1292 = vmatpush2.bf16.msra.mxu0 0
        %1293 = vmatprep.subr.bf16.mxu0 0
        %1294 = vmatpush2.bf16.msra.mxu0 0
        %1295 = vmatprep.mubr.bf16.mxu0 0
        %1296 = vmatmul.mubr.bf16.gmra.mxu0 %v1261
        %v1297 = vpop.f32.mrf.mxu0
        %v1298 = vadd.f32 0.0, %v1297
        %v1299 = vpop.f32.mrf.mxu0
        %v1300 = vpop.f32.mrf.mxu0
        %v1301 = vpop.f32.mrf.mxu0
        %1302 = vdwg.mxu0
        %v1307 = vunpack.c.l.b16 %v1238
        %v1308 = vunpack.c.l.b16 %v1239
        %v1309 = vunpack.c.l.b16 %v1240
        %v1310 = vunpack.c.l.b16 %v1241
        %v1311 = vpack.c.b16 %v1308, %v1307
        %v1312 = vpack.c.b16 %v1310, %v1309
        %1315 = vmatprep.subr.bf16.mxu0 0
        %1316 = vmatpush1.bf16.msra.mxu0 0
        %1317 = vmatprep.subr.bf16.mxu0 0
        %1318 = vmatpush1.bf16.msra.mxu0 0
        %1319 = vmatprep.subr.bf16.mxu0 0
        %1320 = vmatpush1.bf16.msra.mxu0 0
        %1321 = vmatprep.subr.bf16.mxu0 0
        %1322 = vmatpush1.bf16.msra.mxu0 0
        %1323 = vmatprep.subr.bf16.mxu0 0
        %1324 = vmatpush1.bf16.msra.mxu0 0
        %1325 = vmatprep.subr.bf16.mxu0 0
        %1326 = vmatpush1.bf16.msra.mxu0 0
        %1327 = vmatprep.subr.bf16.mxu0 0
        %1328 = vmatpush1.bf16.msra.mxu0 %v1312
        %1329 = vmatprep.subr.bf16.mxu0 0
        %1330 = vmatpush1.bf16.msra.mxu0 %v1311
        %1331 = vmatprep.subr.bf16.mxu0 0
        %1332 = vmatpush2.bf16.msra.mxu0 0
        %1333 = vmatprep.subr.bf16.mxu0 0
        %1334 = vmatpush2.bf16.msra.mxu0 0
        %1335 = vmatprep.subr.bf16.mxu0 0
        %1336 = vmatpush2.bf16.msra.mxu0 0
        %1337 = vmatprep.subr.bf16.mxu0 0
        %1338 = vmatpush2.bf16.msra.mxu0 0
        %1339 = vmatprep.subr.bf16.mxu0 0
        %1340 = vmatpush2.bf16.msra.mxu0 0
        %1341 = vmatprep.subr.bf16.mxu0 0
        %1342 = vmatpush2.bf16.msra.mxu0 0
        %1343 = vmatprep.subr.bf16.mxu0 0
        %1344 = vmatpush2.bf16.msra.mxu0 0
        %1345 = vmatprep.subr.bf16.mxu0 0
        %1346 = vmatpush2.bf16.msra.mxu0 0
        %1347 = vmatprep.mubr.bf16.mxu0 0
        %1348 = vmatmul.mubr.bf16.gmra.mxu0 %v1188
        %v1349 = vpop.f32.mrf.mxu0
        %v1350 = vadd.f32 %v1298, %v1349
        %v1351 = vpop.f32.mrf.mxu0
        %v1352 = vpop.f32.mrf.mxu0
        %v1353 = vpop.f32.mrf.mxu0
        %1354 = vdwg.mxu0
        %s1355 = scalar_lea.vmem %s5, 4
        %v1356 = vld [vmem:[%s1355] sm:$0x1]
        %v1358 = vlaneseq
        %v1359 = vshrl.u32 %v1358, 7
        %v1360 = vsub.s32 0, %v1359
        %v1361 = vrot.slane %v1356, %v1360
        %v1363 = vadd.f32 %v1350, %v1361
        %v1364 = vadd.f32 %v1160, %v1363
        %v1365 = vpack.c.bf16 %v1364, %v1364
        %v1366 = vld [vmem:[%s6] sm:$0xf]
        %v1367 = vld [vmem:[%s6 + $0x4] sm:$0xf]
        %v1368 = vld [vmem:[%s6 + $0x8] sm:$0xf]
        %v1369 = vld [vmem:[%s6 + $0xc] sm:$0xf]
        %v1370 = vld [vmem:[#allocation2] sm:$0x1]
        %v1372 = vlaneseq
        %v1373 = vshrl.u32 %v1372, 7
        %v1374 = vsub.s32 0, %v1373
        %v1375 = vrot.slane %v1370, %v1374
        %v1381 = vunpack.c.l.b16 %v1366
        %v1382 = vunpack.c.l.b16 %v1367
        %v1383 = vunpack.c.l.b16 %v1368
        %v1384 = vunpack.c.l.b16 %v1369
        %v1385 = vpack.c.b16 %v1382, %v1381
        %v1386 = vpack.c.b16 %v1384, %v1383
        %v1390 = vsel %vm373, %v1365, 0
        %1392 = vmatprep.subr.bf16.mxu0 0
        %1393 = vmatpush1.bf16.msra.mxu0 0
        %1394 = vmatprep.subr.bf16.mxu0 0
        %1395 = vmatpush1.bf16.msra.mxu0 0
        %1396 = vmatprep.subr.bf16.mxu0 0
        %1397 = vmatpush1.bf16.msra.mxu0 0
        %1398 = vmatprep.subr.bf16.mxu0 0
        %1399 = vmatpush1.bf16.msra.mxu0 0
        %1400 = vmatprep.subr.bf16.mxu0 0
        %1401 = vmatpush1.bf16.msra.mxu0 0
        %1402 = vmatprep.subr.bf16.mxu0 0
        %1403 = vmatpush1.bf16.msra.mxu0 0
        %1404 = vmatprep.subr.bf16.mxu0 0
        %1405 = vmatpush1.bf16.msra.mxu0 %v1386
        %1406 = vmatprep.subr.bf16.mxu0 0
        %1407 = vmatpush1.bf16.msra.mxu0 %v1385
        %1408 = vmatprep.subr.bf16.mxu0 0
        %1409 = vmatpush2.bf16.msra.mxu0 0
        %1410 = vmatprep.subr.bf16.mxu0 0
        %1411 = vmatpush2.bf16.msra.mxu0 0
        %1412 = vmatprep.subr.bf16.mxu0 0
        %1413 = vmatpush2.bf16.msra.mxu0 0
        %1414 = vmatprep.subr.bf16.mxu0 0
        %1415 = vmatpush2.bf16.msra.mxu0 0
        %1416 = vmatprep.subr.bf16.mxu0 0
        %1417 = vmatpush2.bf16.msra.mxu0 0
        %1418 = vmatprep.subr.bf16.mxu0 0
        %1419 = vmatpush2.bf16.msra.mxu0 0
        %1420 = vmatprep.subr.bf16.mxu0 0
        %1421 = vmatpush2.bf16.msra.mxu0 0
        %1422 = vmatprep.subr.bf16.mxu0 0
        %1423 = vmatpush2.bf16.msra.mxu0 0
        %1424 = vmatprep.mubr.bf16.mxu0 0
        %1425 = vmatmul.mubr.bf16.gmra.mxu0 %v1390
        %v1426 = vpop.f32.mrf.mxu0
        %v1427 = vadd.f32 %v1375, %v1426
        %v1428 = vpop.f32.mrf.mxu0
        %v1429 = vpop.f32.mrf.mxu0
        %v1430 = vpop.f32.mrf.mxu0
        %1431 = vdwg.mxu0
        %vm1432 = vcmask 7168
        %1433 = vst.msk [vmem:[%s346] sm:$0xff] %vm1432, %v1427
        %p1434 = scmp.lt.s32.totalorder %s23, 1
        %s1435 = scalar_select %p1434, %s23, 1
        %s1436 = smul.addr %s1435, 8
        %s1437 = scalar_lea.vmem %s8, %s1436
        // Predicated region
        $region65: #{tpu_custom_call.1} parent=51 // pred_check
          %p1438 = pneg %p214
        $region66: #{tpu_custom_call.1} parent=51 // pred_check_branch
          %1440 = sbr.rel (%p1438) target = $region68
        $region67: #{tpu_custom_call.1} parent=51 // pred_region
          _
        $region68: #{tpu_custom_call.1} parent=51 // pred_fallthru
          _
      $region52: #{tpu_custom_call.1} parent=5 // pred_fallthru
        _
      %p1441 = scmp.le.s32.totalorder 2, %s18
      // Predicated region
      $region69: #{tpu_custom_call.1} parent=5 // pred_check
        %p1442 = pneg %p1441
      $region70: #{tpu_custom_call.1} parent=5 // pred_check_branch
        %1444 = sbr.rel (%p1442) target = $region72
      $region71: #{tpu_custom_call.1} parent=5 // pred_region
        %s1445 = ssub.s32 %s18, 2
        // Predicated region
        $region73: #{tpu_custom_call.1} parent=71 // pred_check
          %p1446 = pneg %p220
        $region74: #{tpu_custom_call.1} parent=71 // pred_check_branch
          %1448 = sbr.rel (%p1446) target = $region76
        $region75: #{tpu_custom_call.1} parent=71 // pred_region
          %p1449 = scmp.lt.s32.totalorder %s24, 1
          %s1450 = scalar_select %p1449, %s24, 1
          %s1451 = smul.addr %s1450, 8
          %s1452 = scalar_lea.vmem %s8, %s1451
        $region76: #{tpu_custom_call.1} parent=71 // pred_fallthru
          _
      $region72: #{tpu_custom_call.1} parent=5 // pred_fallthru
        _
    $region6: #{tpu_custom_call.1} parent=1 // loop_footer
      %s22 = sadd.s32 1, %s18
    $region7: #{tpu_custom_call.1} parent=1 // loop_footer_branch
      %17 = sbr.rel target = $region3
    $region8: #{tpu_custom_call.1} parent=1 // loop_exit
      _
    %1453 = vsyncpa [#allocation4], 1
    %s1454 = scalar_lea.sflag [#allocation4], 1
    %1455 = vsyncpa %s1454, 1
    %1456 = vsyncpa [#allocation6], 1

</llo_original>
